<compile_context>
chip_gen: v7x
topology: tpu7x:2x2x1
jax: 0.10.0
libtpu: 0.0.40
codegen_flags: <defaults>
</compile_context>

<pallas_src>
import functools

import jax
import jax.numpy as jnp
from jax.experimental import pallas as pl
from jax.experimental.pallas import tpu as pltpu


def _round_up(x, m):
    return ((x + m - 1) // m) * m


def _make_fused_kernel(num_layers):
    """Builds the fused kernel for `num_layers` conv1x1+BN+ReLU layers.

    Ref layout per grid step:
      refs[0]                         x block   (1, Cin_pad, thw)  f32
      refs[1 .. 2L]                   (W_l, b_l) pairs: (Cout_l, Cin_l) bf16, (Cout_l, 1) f32
      refs[1 + 2L]                    out block (1, Cout_last, thw) f32
      refs[2 + 2L ..]                 VMEM scratch per intermediate layer (Cout_l, thw) bf16
    """

    def kernel(*refs):
        x_ref = refs[0]
        wb_refs = refs[1:1 + 2 * num_layers]
        o_ref = refs[1 + 2 * num_layers]
        scratch = refs[2 + 2 * num_layers:]

        h = x_ref[0].astype(jnp.bfloat16)                    # (Cin_pad, thw)
        for li in range(num_layers):
            w_ref = wb_refs[2 * li]                          # (Cout, Cin) bf16
            b_ref = wb_refs[2 * li + 1]                      # (Cout, 1)   f32
            y = jnp.dot(w_ref[...], h, preferred_element_type=jnp.float32)
            y = jnp.maximum(y + b_ref[...], 0.0)             # folded bias/BN + ReLU (f32)
            if li + 1 < num_layers:
                scratch[li][...] = y.astype(jnp.bfloat16)    # stays in VMEM, never HBM
                h = scratch[li][...]
            else:
                o_ref[0] = y.astype(o_ref.dtype)
        # NOTE: if profiling ever shows the (tiny) input DMA exposed, bump its depth
        # with pipeline_mode=pl.Buffered(3) on the x BlockSpec.

    return kernel


def plainnet_fused(x3, weights, biases, *, tile_hw):
    """x3: (N, Cin_pad, HWp) f32; weights[l]: (Cout_l, Cin_l) bf16; biases[l]: (Cout_l, 1) f32.

    Returns (N, Cout_last, HWp) f32.
    """
    N, cin_pad, hwp = x3.shape
    num_layers = len(weights)
    cout_last = weights[-1].shape[0]
    assert hwp % tile_hw == 0  # wrapper pads HW, so this always holds

    grid = (N, hwp // tile_hw)

    in_specs = [pl.BlockSpec((1, cin_pad, tile_hw), lambda n, j: (n, 0, j))]
    args = [x3]
    for w, b in zip(weights, biases):
        in_specs.append(pl.BlockSpec(w.shape, lambda n, j: (0, 0)))   # resident weights
        in_specs.append(pl.BlockSpec(b.shape, lambda n, j: (0, 0)))   # resident folded bias
        args += [w, b]

    scratch_shapes = [
        pltpu.VMEM((w.shape[0], tile_hw), jnp.bfloat16) for w in weights[:-1]
    ]

    return pl.pallas_call(
        _make_fused_kernel(num_layers),
        out_shape=jax.ShapeDtypeStruct((N, cout_last, hwp), jnp.float32),
        grid_spec=pltpu.PrefetchScalarGridSpec(
            num_scalar_prefetch=0,
            grid=grid,
            in_specs=in_specs,
            out_specs=pl.BlockSpec((1, cout_last, tile_hw), lambda n, j: (n, 0, j)),
            scratch_shapes=scratch_shapes,
        ),
        compiler_params=pltpu.CompilerParams(
            dimension_semantics=("parallel", "parallel"),
            vmem_limit_bytes=32 * 1024 * 1024,
        ),
    )(*args)


def init_plainnet_params(key, input_channels=3, layer_cfg=(128, 128, 256)):
    """Deterministic synthetic parameters mirroring the nn.Module __init__ shapes."""
    params = []
    cin = input_channels
    for li, cout in enumerate(layer_cfg):
        k = jax.random.fold_in(key, li)
        kw, kb, kg, kbe, km, kv = jax.random.split(k, 6)
        # Conv2d(cin, cout, kernel_size=1): weight (cout, cin[,1,1]), bias (cout,)
        w = jax.random.normal(kw, (cout, cin), jnp.float32) * (1.0 / jnp.sqrt(cin))
        b = jax.random.normal(kb, (cout,), jnp.float32) * 0.1
        # BatchNorm2d(cout): gamma, beta, running_mean, running_var
        gamma = 1.0 + 0.1 * jax.random.normal(kg, (cout,), jnp.float32)
        beta = 0.1 * jax.random.normal(kbe, (cout,), jnp.float32)
        running_mean = 0.1 * jax.random.normal(km, (cout,), jnp.float32)
        running_var = 1.0 + 0.1 * jax.random.uniform(kv, (cout,), jnp.float32)
        params.append(dict(w=w, b=b, gamma=gamma, beta=beta,
                           mean=running_mean, var=running_var))
        cin = cout
    return params


@functools.partial(jax.jit, static_argnames=("tile_hw",))
def plainnet_forward(x_nchw, params, *, tile_hw=512, eps=1e-5):
    """x_nchw: (N, C, H, W) f32 -> (N, C_last, H, W) f32 (eval-mode BN)."""
    N, C, H, W = x_nchw.shape
    HW = H * W

    # Fold BN (eval) into the conv:  W' = scale*W,  b' = scale*(b - mean) + beta.
    weights, biases = [], []
    for p in params:
        scale = p["gamma"] / jnp.sqrt(p["var"] + eps)
        w = p["w"] * scale[:, None]                       # (Cout, Cin) f32
        b = scale * (p["b"] - p["mean"]) + p["beta"]      # (Cout,)     f32
        kpad = _round_up(w.shape[1], 8) - w.shape[1]      # Cin=3 -> pad to 8 sublanes
        if kpad:
            w = jnp.pad(w, ((0, 0), (0, kpad)))
        weights.append(w.astype(jnp.bfloat16))
        biases.append(b[:, None].astype(jnp.float32))

    # NCHW viewed as (N, C, H*W): no layout transpose needed anywhere.
    x3 = x_nchw.reshape(N, C, HW).astype(jnp.float32)
    cin_pad = _round_up(C, 8)
    if cin_pad != C:
        x3 = jnp.pad(x3, ((0, 0), (0, cin_pad - C), (0, 0)))

    # Spatial tile: lane-dense (multiple of 128); pad HW up to a tile multiple.
    thw = _round_up(min(tile_hw, _round_up(HW, 128)), 128)
    hwp = _round_up(HW, thw)
    if hwp != HW:
        x3 = jnp.pad(x3, ((0, 0), (0, 0), (0, hwp - HW)))

    out = plainnet_fused(x3, weights, biases, tile_hw=thw)
    cout = out.shape[1]
    return out[:, :, :HW].reshape(N, cout, H, W)


def plainnet_reference(x_nchw, params, eps=1e-5, matmul_dtype=jnp.bfloat16):
    """Plain-JAX reference.  With matmul_dtype=bfloat16 it mirrors the kernel's dtype
    path (bf16 MXU operands, f32 accumulation, f32 epilogue); with float32 it is the
    exact eval-mode forward of the PyTorch module."""
    N, C, H, W = x_nchw.shape
    h = x_nchw.reshape(N, C, H * W).astype(jnp.float32)
    for p in params:
        scale = p["gamma"] / jnp.sqrt(p["var"] + eps)
        w = (p["w"] * scale[:, None]).astype(matmul_dtype)
        b = scale * (p["b"] - p["mean"]) + p["beta"]
        y = jnp.einsum("oc,ncs->nos", w, h.astype(matmul_dtype),
                       preferred_element_type=jnp.float32)
        h = jnp.maximum(y + b[None, :, None], 0.0)
    return h.reshape(N, h.shape[1], H, W)


if __name__ == "__main__":
    key = jax.random.PRNGKey(0)
    kx, kp = jax.random.split(key)

    # Small shapes consistent with module defaults: input_channels=3.
    N, C, H, W = 2, 3, 32, 32        # H*W = 1024 -> two lane-dense 512-wide spatial tiles
    x = jax.random.normal(kx, (N, C, H, W), jnp.float32)
    params = init_plainnet_params(kp, input_channels=C, layer_cfg=(128, 128, 256))

    out = jax.block_until_ready(plainnet_forward(x, params))
    assert out.shape == (N, 256, H, W), out.shape

    # Tight check vs a plain-JAX reference using the same bf16-matmul / f32-accum path.
    ref_bf16 = plainnet_reference(x, params, matmul_dtype=jnp.bfloat16)
    assert jnp.allclose(out, ref_bf16, atol=2e-3, rtol=2e-3), \
        float(jnp.max(jnp.abs(out - ref_bf16)))

    # Loose check vs the exact f32 eval-mode forward (difference = bf16 matmul rounding).
    ref_f32 = plainnet_reference(x, params, matmul_dtype=jnp.float32)
    assert jnp.allclose(out, ref_f32, atol=1e-1, rtol=1e-1), \
        float(jnp.max(jnp.abs(out - ref_f32)))

    print("KERNEL_OK")
</pallas_src>

<mosaic_0001>
module attributes {stable_mosaic.version = 11 : i64} {
  func.func @kernel(%arg0: i32, %arg1: i32, %arg2: memref<1x8x512xf32, #tpu.memory_space<vmem>>, %arg3: memref<128x8xbf16, #tpu.memory_space<vmem>>, %arg4: memref<128x1xf32, #tpu.memory_space<vmem>>, %arg5: memref<128x128xbf16, #tpu.memory_space<vmem>>, %arg6: memref<128x1xf32, #tpu.memory_space<vmem>>, %arg7: memref<256x128xbf16, #tpu.memory_space<vmem>>, %arg8: memref<256x1xf32, #tpu.memory_space<vmem>>, %arg9: memref<1x256x512xf32, #tpu.memory_space<vmem>>, %arg10: memref<128x512xbf16, #tpu.memory_space<vmem>>, %arg11: memref<128x512xbf16, #tpu.memory_space<vmem>>) attributes {dimension_semantics = [#tpu.dimension_semantics<parallel>, #tpu.dimension_semantics<parallel>], iteration_bounds = array<i64: 2, 2>, scalar_prefetch = 0 : i64, scratch_operands = 2 : i64, tpu.core_type = #tpu.core_type<tc>, window_params = [{transform_indices = @transform_0, window_bounds = array<i64: 1, 8, 512>}, {pipeline_mode = #tpu.pipeline_mode<synchronous>, transform_indices = @transform_1, window_bounds = array<i64: 128, 8>}, {pipeline_mode = #tpu.pipeline_mode<synchronous>, transform_indices = @transform_2, window_bounds = array<i64: 128, 1>}, {pipeline_mode = #tpu.pipeline_mode<synchronous>, transform_indices = @transform_3, window_bounds = array<i64: 128, 128>}, {pipeline_mode = #tpu.pipeline_mode<synchronous>, transform_indices = @transform_4, window_bounds = array<i64: 128, 1>}, {pipeline_mode = #tpu.pipeline_mode<synchronous>, transform_indices = @transform_5, window_bounds = array<i64: 256, 128>}, {pipeline_mode = #tpu.pipeline_mode<synchronous>, transform_indices = @transform_6, window_bounds = array<i64: 256, 1>}, {transform_indices = @transform_7, window_bounds = array<i64: 1, 256, 512>}]} {
    %c0 = arith.constant 0 : index
    %c0_0 = arith.constant 0 : index
    %c0_1 = arith.constant 0 : index
    %0 = vector.load %arg2[%c0, %c0_0, %c0_1] : memref<1x8x512xf32, #tpu.memory_space<vmem>>, vector<1x8x512xf32>
    %1 = vector.shape_cast %0 : vector<1x8x512xf32> to vector<8x512xf32>
    %2 = arith.truncf %1 : vector<8x512xf32> to vector<8x512xbf16>
    %c0_2 = arith.constant 0 : index
    %c0_3 = arith.constant 0 : index
    %3 = vector.load %arg3[%c0_2, %c0_3] : memref<128x8xbf16, #tpu.memory_space<vmem>>, vector<128x8xbf16>
    %cst = arith.constant dense<0.000000e+00> : vector<128x512xf32>
    %4 = tpu.matmul %3, %2, %cst {dimension_numbers = #tpu.dot_dimension_numbers<[1], [0], [0], [1], [0, 0, 1, 1], [], []>} : vector<128x8xbf16>, vector<8x512xbf16>, vector<128x512xf32> -> vector<128x512xf32>
    %c0_4 = arith.constant 0 : index
    %c0_5 = arith.constant 0 : index
    %5 = vector.load %arg4[%c0_4, %c0_5] : memref<128x1xf32, #tpu.memory_space<vmem>>, vector<128x1xf32>
    %6 = vector.broadcast %5 : vector<128x1xf32> to vector<128x512xf32>
    %7 = arith.addf %4, %6 : vector<128x512xf32>
    %cst_6 = arith.constant 0.000000e+00 : f32
    %8 = vector.broadcast %cst_6 : f32 to vector<128x512xf32>
    %9 = arith.maximumf %7, %8 : vector<128x512xf32>
    %10 = arith.truncf %9 : vector<128x512xf32> to vector<128x512xbf16>
    %c0_7 = arith.constant 0 : index
    %c0_8 = arith.constant 0 : index
    %11 = vector.load %arg10[%c0_7, %c0_8] : memref<128x512xbf16, #tpu.memory_space<vmem>>, vector<128x512xbf16>
    tpu.vector_store %arg10[%c0_7, %c0_8], %10 {strides = array<i32>} : memref<128x512xbf16, #tpu.memory_space<vmem>>, vector<128x512xbf16>,
    %c0_9 = arith.constant 0 : index
    %c0_10 = arith.constant 0 : index
    %12 = vector.load %arg10[%c0_9, %c0_10] : memref<128x512xbf16, #tpu.memory_space<vmem>>, vector<128x512xbf16>
    %c0_11 = arith.constant 0 : index
    %c0_12 = arith.constant 0 : index
    %13 = vector.load %arg5[%c0_11, %c0_12] : memref<128x128xbf16, #tpu.memory_space<vmem>>, vector<128x128xbf16>
    %cst_13 = arith.constant dense<0.000000e+00> : vector<128x512xf32>
    %14 = tpu.matmul %13, %12, %cst_13 {dimension_numbers = #tpu.dot_dimension_numbers<[1], [0], [0], [1], [0, 0, 1, 1], [], []>} : vector<128x128xbf16>, vector<128x512xbf16>, vector<128x512xf32> -> vector<128x512xf32>
    %c0_14 = arith.constant 0 : index
    %c0_15 = arith.constant 0 : index
    %15 = vector.load %arg6[%c0_14, %c0_15] : memref<128x1xf32, #tpu.memory_space<vmem>>, vector<128x1xf32>
    %16 = vector.broadcast %15 : vector<128x1xf32> to vector<128x512xf32>
    %17 = arith.addf %14, %16 : vector<128x512xf32>
    %cst_16 = arith.constant 0.000000e+00 : f32
    %18 = vector.broadcast %cst_16 : f32 to vector<128x512xf32>
    %19 = arith.maximumf %17, %18 : vector<128x512xf32>
    %20 = arith.truncf %19 : vector<128x512xf32> to vector<128x512xbf16>
    %c0_17 = arith.constant 0 : index
    %c0_18 = arith.constant 0 : index
    %21 = vector.load %arg11[%c0_17, %c0_18] : memref<128x512xbf16, #tpu.memory_space<vmem>>, vector<128x512xbf16>
    tpu.vector_store %arg11[%c0_17, %c0_18], %20 {strides = array<i32>} : memref<128x512xbf16, #tpu.memory_space<vmem>>, vector<128x512xbf16>,
    %c0_19 = arith.constant 0 : index
    %c0_20 = arith.constant 0 : index
    %22 = vector.load %arg11[%c0_19, %c0_20] : memref<128x512xbf16, #tpu.memory_space<vmem>>, vector<128x512xbf16>
    %c0_21 = arith.constant 0 : index
    %c0_22 = arith.constant 0 : index
    %23 = vector.load %arg7[%c0_21, %c0_22] : memref<256x128xbf16, #tpu.memory_space<vmem>>, vector<256x128xbf16>
    %cst_23 = arith.constant dense<0.000000e+00> : vector<256x512xf32>
    %24 = tpu.matmul %23, %22, %cst_23 {dimension_numbers = #tpu.dot_dimension_numbers<[1], [0], [0], [1], [0, 0, 1, 1], [], []>} : vector<256x128xbf16>, vector<128x512xbf16>, vector<256x512xf32> -> vector<256x512xf32>
    %c0_24 = arith.constant 0 : index
    %c0_25 = arith.constant 0 : index
    %25 = vector.load %arg8[%c0_24, %c0_25] : memref<256x1xf32, #tpu.memory_space<vmem>>, vector<256x1xf32>
    %26 = vector.broadcast %25 : vector<256x1xf32> to vector<256x512xf32>
    %27 = arith.addf %24, %26 : vector<256x512xf32>
    %cst_26 = arith.constant 0.000000e+00 : f32
    %28 = vector.broadcast %cst_26 : f32 to vector<256x512xf32>
    %29 = arith.maximumf %27, %28 : vector<256x512xf32>
    %c0_27 = arith.constant 0 : index
    %c0_28 = arith.constant 0 : index
    %c0_29 = arith.constant 0 : index
    %30 = vector.load %arg9[%c0_27, %c0_28, %c0_29] : memref<1x256x512xf32, #tpu.memory_space<vmem>>, vector<1x256x512xf32>
    %31 = vector.shape_cast %30 : vector<1x256x512xf32> to vector<256x512xf32>
    %32 = vector.shape_cast %29 : vector<256x512xf32> to vector<1x256x512xf32>
    tpu.vector_store %arg9[%c0_27, %c0_28, %c0_29], %32 {strides = array<i32>} : memref<1x256x512xf32, #tpu.memory_space<vmem>>, vector<1x256x512xf32>,
    return
  }
  func.func @transform_0(%arg0: i32, %arg1: i32) -> (i32, i32, i32) {
    %c0_i32 = arith.constant 0 : i32
    %c0_i32_0 = arith.constant 0 : i32
    return %arg0, %c0_i32, %arg1 : i32, i32, i32
  }
  func.func @transform_1(%arg0: i32, %arg1: i32) -> (i32, i32) {
    %c0_i32 = arith.constant 0 : i32
    %c0_i32_0 = arith.constant 0 : i32
    %c0_i32_1 = arith.constant 0 : i32
    return %c0_i32, %c0_i32_0 : i32, i32
  }
  func.func @transform_2(%arg0: i32, %arg1: i32) -> (i32, i32) {
    %c0_i32 = arith.constant 0 : i32
    %c0_i32_0 = arith.constant 0 : i32
    %c0_i32_1 = arith.constant 0 : i32
    return %c0_i32, %c0_i32_0 : i32, i32
  }
  func.func @transform_3(%arg0: i32, %arg1: i32) -> (i32, i32) {
    %c0_i32 = arith.constant 0 : i32
    %c0_i32_0 = arith.constant 0 : i32
    %c0_i32_1 = arith.constant 0 : i32
    return %c0_i32, %c0_i32_0 : i32, i32
  }
  func.func @transform_4(%arg0: i32, %arg1: i32) -> (i32, i32) {
    %c0_i32 = arith.constant 0 : i32
    %c0_i32_0 = arith.constant 0 : i32
    %c0_i32_1 = arith.constant 0 : i32
    return %c0_i32, %c0_i32_0 : i32, i32
  }
  func.func @transform_5(%arg0: i32, %arg1: i32) -> (i32, i32) {
    %c0_i32 = arith.constant 0 : i32
    %c0_i32_0 = arith.constant 0 : i32
    %c0_i32_1 = arith.constant 0 : i32
    return %c0_i32, %c0_i32_0 : i32, i32
  }
  func.func @transform_6(%arg0: i32, %arg1: i32) -> (i32, i32) {
    %c0_i32 = arith.constant 0 : i32
    %c0_i32_0 = arith.constant 0 : i32
    %c0_i32_1 = arith.constant 0 : i32
    return %c0_i32, %c0_i32_0 : i32, i32
  }
  func.func @transform_7(%arg0: i32, %arg1: i32) -> (i32, i32, i32) {
    %c0_i32 = arith.constant 0 : i32
    %c0_i32_0 = arith.constant 0 : i32
    return %arg0, %c0_i32, %arg1 : i32, i32, i32
  }
}

</mosaic_0001>

<llo_original>
// kernel: plainnet_forward.1
$region0: #{plainnet_forward.1}
  #allocation0 [shape = 'u32[]', space=smem, size = 0x4, offset = 0x4, fixed_abs, tag = 'smem constant byte address 0x4 - core index']
  #allocation1 [shape = 'u32[144,128]{1,0:T(1,128)}', space=vmem, size = 0x12000, scoped, tag = 'internal scratch']
  #allocation2 [shape = 'bf16[128,512]{1,0:T(16,128)(2,1)}', space=vmem, size = 0x20000, scoped, tag = 'scratch operand']
  #allocation3 [shape = 'bf16[128,512]{1,0:T(16,128)(2,1)}', space=vmem, size = 0x20000, scoped, tag = 'scratch operand']
  %s0 = inlined_call_operand.vmem [shape: f32[2,8,1024], index: 0, kind: input, shape index: {}]
  %s1 = inlined_call_operand.vmem [shape: bf16[128,8], index: 1, kind: input, shape index: {}]
  %s2 = inlined_call_operand.vmem [shape: f32[128,1], index: 2, kind: input, shape index: {}]
  %s3 = inlined_call_operand.vmem [shape: bf16[128,128], index: 3, kind: input, shape index: {}]
  %s4 = inlined_call_operand.vmem [shape: f32[128,1], index: 4, kind: input, shape index: {}]
  %s5 = inlined_call_operand.vmem [shape: bf16[256,128], index: 5, kind: input, shape index: {}]
  %s6 = inlined_call_operand.vmem [shape: f32[256,1], index: 6, kind: input, shape index: {}]
  %s7 = inlined_call_operand.vmem [shape: f32[2,256,1024], index: 7, kind: output, shape index: {}]
  %s8 = sld [smem:[#allocation0]]
  $region80: #{plainnet_forward.1} parent=0
    _
  %s10 = ssub.s32 1, %s8
  %s11 = scalar_select 0, %s10, %s8
  $region1: #{plainnet_forward.1} parent=0
    #allocation4 [shape = 'u8[1048576]{0}', space=vmem, size = 0x100000, scoped, tag = 'output window, operand 0']
    loop: start=0, step=1, limit=6
    $region2: #{plainnet_forward.1} parent=1 // loop_pre_header
      _
    $region3: #{plainnet_forward.1} parent=1 // loop_header
      %s13 = sphi 0, %s17
      %p14 = scmp.ge.s32.totalorder %s13, 6
      %s20 = sphi 0, %s32
      %s21 = sphi 0, %s28
      %s22 = sphi 0, %s20
      %s23 = sphi 0, %s21
      %s24 = sphi 0, %s22
      %s25 = sphi 0, %s23
      %s37 = sphi 0, %s39
      %s40 = sphi 0, %s37
      %s41 = sphi 0, %s40
      %s57 = sphi 0, %s41
      %s61 = sphi 0, %s61
      %s63 = sphi 0, %s61
      %s64 = sphi 0, %s63
      %s78 = sphi 0, %s64
      %s82 = sphi 0, %s82
      %s84 = sphi 0, %s82
      %s85 = sphi 0, %s84
      %s99 = sphi 0, %s85
      %s103 = sphi 0, %s103
      %s105 = sphi 0, %s103
      %s106 = sphi 0, %s105
      %s120 = sphi 0, %s106
      %s124 = sphi 0, %s124
      %s126 = sphi 0, %s124
      %s127 = sphi 0, %s126
      %s141 = sphi 0, %s127
      %s145 = sphi 0, %s145
      %s147 = sphi 0, %s145
      %s148 = sphi 0, %s147
      %s162 = sphi 0, %s148
      %s166 = sphi 0, %s166
      %s168 = sphi 0, %s166
      %s169 = sphi 0, %s168
      %s183 = sphi 0, %s169
      %s191 = sphi 0, %s193
      %s194 = sphi 0, %s191
      %s195 = sphi 0, %s194
      %s211 = sphi 0, %s195
    $region4: #{plainnet_forward.1} parent=1 // loop_header_branch
      %16 = sbr.rel (%p14) target = $region8
    $region5: #{plainnet_forward.1} parent=1 // loop_body
      %s18 = ssub.s32 %s13, 1
      %s19 = ssub.s32 %s13, 2
      %s26 = sadd.s32 1, %s21
      %p27 = scmp.ge.s32.totalorder %s26, 2
      %s28 = scalar_select %p27, 0, %s26
      %s29 = sadd.s32 1, %s20
      %s30 = scalar_select %p27, %s29, %s20
      %p31 = scmp.ge.s32.totalorder %s30, 2
      %s32 = scalar_select %p31, 0, %s30
      %s33 = ssub.s32 %s20, %s32
      %s34 = ssub.s32 %s21, %s28
      %s35 = sor.u32 %s33, %s34
      %p36 = scmp.eq.s32.totalorder %s35, 0
      %s38 = sadd.s32 %s37, 1
      %s39 = scalar_select %p36, %s37, %s38
      %p42 = pneg %p36
      %p43 = scmp.eq.s32.totalorder %s13, 3
      %p44 = por %p42, %p43
      %p45 = scmp.ne.s32.totalorder %s37, %s40
      %p46 = scmp.eq.s32.totalorder %s13, 0
      %p47 = por %p45, %p46
      %p48 = scmp.ne.s32.totalorder %s37, %s40
      %p49 = scmp.eq.s32.totalorder %s18, 3
      %p50 = por %p48, %p49
      %p51 = scmp.ne.s32.totalorder %s40, %s41
      %p52 = scmp.eq.s32.totalorder %s18, 0
      %p53 = por %p51, %p52
      %p54 = scmp.ne.s32.totalorder %s40, %s41
      %p55 = scmp.eq.s32.totalorder %s19, 3
      %p56 = por %p54, %p55
      %p58 = scmp.ne.s32.totalorder %s41, %s57
      %p59 = scmp.eq.s32.totalorder %s19, 0
      %p60 = por %p58, %p59
      %s62 = sadd.s32 %s61, 1
      %p65 = scmp.eq.s32.totalorder %s13, 3
      %p66 = scmp.ne.s32.totalorder %s61, %s63
      %p67 = scmp.eq.s32.totalorder %s13, 0
      %p68 = por %p66, %p67
      %p69 = scmp.ne.s32.totalorder %s61, %s63
      %p70 = scmp.eq.s32.totalorder %s18, 3
      %p71 = por %p69, %p70
      %p72 = scmp.ne.s32.totalorder %s63, %s64
      %p73 = scmp.eq.s32.totalorder %s18, 0
      %p74 = por %p72, %p73
      %p75 = scmp.ne.s32.totalorder %s63, %s64
      %p76 = scmp.eq.s32.totalorder %s19, 3
      %p77 = por %p75, %p76
      %p79 = scmp.ne.s32.totalorder %s64, %s78
      %p80 = scmp.eq.s32.totalorder %s19, 0
      %p81 = por %p79, %p80
      %s83 = sadd.s32 %s82, 1
      %p86 = scmp.eq.s32.totalorder %s13, 3
      %p87 = scmp.ne.s32.totalorder %s82, %s84
      %p88 = scmp.eq.s32.totalorder %s13, 0
      %p89 = por %p87, %p88
      %p90 = scmp.ne.s32.totalorder %s82, %s84
      %p91 = scmp.eq.s32.totalorder %s18, 3
      %p92 = por %p90, %p91
      %p93 = scmp.ne.s32.totalorder %s84, %s85
      %p94 = scmp.eq.s32.totalorder %s18, 0
      %p95 = por %p93, %p94
      %p96 = scmp.ne.s32.totalorder %s84, %s85
      %p97 = scmp.eq.s32.totalorder %s19, 3
      %p98 = por %p96, %p97
      %p100 = scmp.ne.s32.totalorder %s85, %s99
      %p101 = scmp.eq.s32.totalorder %s19, 0
      %p102 = por %p100, %p101
      %s104 = sadd.s32 %s103, 1
      %p107 = scmp.eq.s32.totalorder %s13, 3
      %p108 = scmp.ne.s32.totalorder %s103, %s105
      %p109 = scmp.eq.s32.totalorder %s13, 0
      %p110 = por %p108, %p109
      %p111 = scmp.ne.s32.totalorder %s103, %s105
      %p112 = scmp.eq.s32.totalorder %s18, 3
      %p113 = por %p111, %p112
      %p114 = scmp.ne.s32.totalorder %s105, %s106
      %p115 = scmp.eq.s32.totalorder %s18, 0
      %p116 = por %p114, %p115
      %p117 = scmp.ne.s32.totalorder %s105, %s106
      %p118 = scmp.eq.s32.totalorder %s19, 3
      %p119 = por %p117, %p118
      %p121 = scmp.ne.s32.totalorder %s106, %s120
      %p122 = scmp.eq.s32.totalorder %s19, 0
      %p123 = por %p121, %p122
      %s125 = sadd.s32 %s124, 1
      %p128 = scmp.eq.s32.totalorder %s13, 3
      %p129 = scmp.ne.s32.totalorder %s124, %s126
      %p130 = scmp.eq.s32.totalorder %s13, 0
      %p131 = por %p129, %p130
      %p132 = scmp.ne.s32.totalorder %s124, %s126
      %p133 = scmp.eq.s32.totalorder %s18, 3
      %p134 = por %p132, %p133
      %p135 = scmp.ne.s32.totalorder %s126, %s127
      %p136 = scmp.eq.s32.totalorder %s18, 0
      %p137 = por %p135, %p136
      %p138 = scmp.ne.s32.totalorder %s126, %s127
      %p139 = scmp.eq.s32.totalorder %s19, 3
      %p140 = por %p138, %p139
      %p142 = scmp.ne.s32.totalorder %s127, %s141
      %p143 = scmp.eq.s32.totalorder %s19, 0
      %p144 = por %p142, %p143
      %s146 = sadd.s32 %s145, 1
      %p149 = scmp.eq.s32.totalorder %s13, 3
      %p150 = scmp.ne.s32.totalorder %s145, %s147
      %p151 = scmp.eq.s32.totalorder %s13, 0
      %p152 = por %p150, %p151
      %p153 = scmp.ne.s32.totalorder %s145, %s147
      %p154 = scmp.eq.s32.totalorder %s18, 3
      %p155 = por %p153, %p154
      %p156 = scmp.ne.s32.totalorder %s147, %s148
      %p157 = scmp.eq.s32.totalorder %s18, 0
      %p158 = por %p156, %p157
      %p159 = scmp.ne.s32.totalorder %s147, %s148
      %p160 = scmp.eq.s32.totalorder %s19, 3
      %p161 = por %p159, %p160
      %p163 = scmp.ne.s32.totalorder %s148, %s162
      %p164 = scmp.eq.s32.totalorder %s19, 0
      %p165 = por %p163, %p164
      %s167 = sadd.s32 %s166, 1
      %p170 = scmp.eq.s32.totalorder %s13, 3
      %p171 = scmp.ne.s32.totalorder %s166, %s168
      %p172 = scmp.eq.s32.totalorder %s13, 0
      %p173 = por %p171, %p172
      %p174 = scmp.ne.s32.totalorder %s166, %s168
      %p175 = scmp.eq.s32.totalorder %s18, 3
      %p176 = por %p174, %p175
      %p177 = scmp.ne.s32.totalorder %s168, %s169
      %p178 = scmp.eq.s32.totalorder %s18, 0
      %p179 = por %p177, %p178
      %p180 = scmp.ne.s32.totalorder %s168, %s169
      %p181 = scmp.eq.s32.totalorder %s19, 3
      %p182 = por %p180, %p181
      %p184 = scmp.ne.s32.totalorder %s169, %s183
      %p185 = scmp.eq.s32.totalorder %s19, 0
      %p186 = por %p184, %p185
      %s187 = ssub.s32 %s20, %s32
      %s188 = ssub.s32 %s21, %s28
      %s189 = sor.u32 %s187, %s188
      %p190 = scmp.eq.s32.totalorder %s189, 0
      %s192 = sadd.s32 %s191, 1
      %s193 = scalar_select %p190, %s191, %s192
      %p196 = pneg %p190
      %p197 = scmp.eq.s32.totalorder %s13, 3
      %p198 = por %p196, %p197
      %p199 = scmp.ne.s32.totalorder %s191, %s194
      %p200 = scmp.eq.s32.totalorder %s13, 0
      %p201 = por %p199, %p200
      %p202 = scmp.ne.s32.totalorder %s191, %s194
      %p203 = scmp.eq.s32.totalorder %s18, 3
      %p204 = por %p202, %p203
      %p205 = scmp.ne.s32.totalorder %s194, %s195
      %p206 = scmp.eq.s32.totalorder %s18, 0
      %p207 = por %p205, %p206
      %p208 = scmp.ne.s32.totalorder %s194, %s195
      %p209 = scmp.eq.s32.totalorder %s19, 3
      %p210 = por %p208, %p209
      %p212 = scmp.ne.s32.totalorder %s195, %s211
      %p213 = scmp.eq.s32.totalorder %s19, 0
      %p214 = por %p212, %p213
      %p215 = scmp.le.s32.totalorder 1, %s13
      %p216 = scmp.lt.s32.totalorder %s13, 5
      %p217 = pnand %p215, %p216
      %p218 = pneg %p217
      // Predicated region
      $region9: #{plainnet_forward.1} parent=5 // pred_check
        _
      $region10: #{plainnet_forward.1} parent=5 // pred_check_branch
        %220 = sbr.rel (%p217) target = $region12
      $region11: #{plainnet_forward.1} parent=5 // pred_region
        %s221 = ssub.s32 %s13, 1
        // Predicated region
        $region13: #{plainnet_forward.1} parent=11 // pred_check
          %p222 = pneg %p74
        $region14: #{plainnet_forward.1} parent=11 // pred_check_branch
          %224 = sbr.rel (%p222) target = $region16
        $region15: #{plainnet_forward.1} parent=11 // pred_region
          _
        $region16: #{plainnet_forward.1} parent=11 // pred_fallthru
          _
        // Predicated region
        $region17: #{plainnet_forward.1} parent=11 // pred_check
          %p225 = pneg %p95
        $region18: #{plainnet_forward.1} parent=11 // pred_check_branch
          %227 = sbr.rel (%p225) target = $region20
        $region19: #{plainnet_forward.1} parent=11 // pred_region
          _
        $region20: #{plainnet_forward.1} parent=11 // pred_fallthru
          _
        // Predicated region
        $region21: #{plainnet_forward.1} parent=11 // pred_check
          %p228 = pneg %p116
        $region22: #{plainnet_forward.1} parent=11 // pred_check_branch
          %230 = sbr.rel (%p228) target = $region24
        $region23: #{plainnet_forward.1} parent=11 // pred_region
          _
        $region24: #{plainnet_forward.1} parent=11 // pred_fallthru
          _
        // Predicated region
        $region25: #{plainnet_forward.1} parent=11 // pred_check
          %p231 = pneg %p137
        $region26: #{plainnet_forward.1} parent=11 // pred_check_branch
          %233 = sbr.rel (%p231) target = $region28
        $region27: #{plainnet_forward.1} parent=11 // pred_region
          _
        $region28: #{plainnet_forward.1} parent=11 // pred_fallthru
          _
        // Predicated region
        $region29: #{plainnet_forward.1} parent=11 // pred_check
          %p234 = pneg %p158
        $region30: #{plainnet_forward.1} parent=11 // pred_check_branch
          %236 = sbr.rel (%p234) target = $region32
        $region31: #{plainnet_forward.1} parent=11 // pred_region
          _
        $region32: #{plainnet_forward.1} parent=11 // pred_fallthru
          _
        // Predicated region
        $region33: #{plainnet_forward.1} parent=11 // pred_check
          %p237 = pneg %p179
        $region34: #{plainnet_forward.1} parent=11 // pred_check_branch
          %239 = sbr.rel (%p237) target = $region36
        $region35: #{plainnet_forward.1} parent=11 // pred_region
          _
        $region36: #{plainnet_forward.1} parent=11 // pred_fallthru
          _
      $region12: #{plainnet_forward.1} parent=5 // pred_fallthru
        _
      %p240 = scmp.lt.s32.totalorder %s13, 4
      // Predicated region
      $region37: #{plainnet_forward.1} parent=5 // pred_check
        %p241 = pneg %p240
      $region38: #{plainnet_forward.1} parent=5 // pred_check_branch
        %243 = sbr.rel (%p241) target = $region40
      $region39: #{plainnet_forward.1} parent=5 // pred_region
        // Predicated region
        $region41: #{plainnet_forward.1} parent=39 // pred_check
          %p244 = pneg %p47
        $region42: #{plainnet_forward.1} parent=39 // pred_check_branch
          %246 = sbr.rel (%p244) target = $region44
        $region43: #{plainnet_forward.1} parent=39 // pred_region
          %s247 = smul.u32 4, %s21
          %p248 = scmp.lt.s32.totalorder %s20, 1
          %s249 = scalar_select %p248, %s20, 1
          %p250 = scmp.lt.s32.totalorder %s247, 7
          %s251 = scalar_select %p250, %s247, 7
          %s252 = smul.addr %s249, 8
          %s253 = sadd.s32 %s251, %s252
          %s254 = smul.addr %s253, 8
          %s255 = scalar_lea.vmem %s0, %s254
          %s256 = smul.u32 4, %s21
        $region44: #{plainnet_forward.1} parent=39 // pred_fallthru
          _
      $region40: #{plainnet_forward.1} parent=5 // pred_fallthru
        _
      %p257 = scmp.le.s32.totalorder 1, %s13
      %p258 = scmp.lt.s32.totalorder %s13, 5
      %p259 = pnand %p257, %p258
      %p260 = pneg %p259
      // Predicated region
      $region45: #{plainnet_forward.1} parent=5 // pred_check
        _
      $region46: #{plainnet_forward.1} parent=5 // pred_check_branch
        %262 = sbr.rel (%p259) target = $region48
      $region47: #{plainnet_forward.1} parent=5 // pred_region
        %s263 = ssub.s32 %s13, 1
        %s264 = smul.u32 4, %s23
        %p265 = scmp.lt.s32.totalorder %s22, 1
        %s266 = scalar_select %p265, %s22, 1
        %p267 = scmp.lt.s32.totalorder %s264, 7
        %s268 = scalar_select %p267, %s264, 7
        %s269 = smul.addr %s266, 8
        %s270 = sadd.s32 %s268, %s269
        %s271 = smul.addr %s270, 8
        %s272 = scalar_lea.vmem %s0, %s271
        %p273 = pneg %p53
        %p274 = pneg %p50
        %p275 = pneg %p74
        %p276 = pneg %p71
        %p277 = pneg %p95
        %p278 = pneg %p92
        %p279 = pneg %p116
        %p280 = pneg %p113
        %p281 = pneg %p137
        %p282 = pneg %p134
        %p283 = pneg %p158
        %p284 = pneg %p155
        %p285 = pneg %p179
        %p286 = pneg %p176
        %p287 = pneg %p207
        %p288 = pneg %p204
        %s289 = sand.u32 %s194, 1
        %s290 = sand.u32 %s194, 1
        %s291 = smul.addr %s290, 1024
        %s292 = scalar_lea.vmem [#allocation4], %s291
        %s293 = smul.u32 4, %s23
        %p294 = scmp.lt.s32.totalorder %s22, 1
        %s295 = scalar_select %p294, %s22, 1
        %p296 = scmp.lt.s32.totalorder %s293, 7
        %s297 = scalar_select %p296, %s293, 7
        %s298 = smul.addr %s295, 8
        %s299 = sadd.s32 %s297, %s298
        %s300 = smul.addr %s299, 8
        %s301 = scalar_lea.vmem %s0, %s300
        %s302 = smul.u32 4, %s23
        %s303 = smul.u32 4, %s23
        %v305 = vld [vmem:[%s301] sm:$0xff]
        %v306 = vld [vmem:[%s301 + $0x8] sm:$0xff]
        %v307 = vld [vmem:[%s301 + $0x10] sm:$0xff]
        %v308 = vld [vmem:[%s301 + $0x18] sm:$0xff]
        %v309 = vpack.c.bf16 %v305, %v305
        %v310 = vpack.c.bf16 %v306, %v306
        %v311 = vpack.c.bf16 %v307, %v307
        %v312 = vpack.c.bf16 %v308, %v308
        %v313 = vld [vmem:[%s1] sm:$0xf]
        %v314 = vld [vmem:[%s1 + $0x4] sm:$0xf]
        %v315 = vld [vmem:[%s1 + $0x8] sm:$0xf]
        %v316 = vld [vmem:[%s1 + $0xc] sm:$0xf]
        %v317 = vld [vmem:[%s1 + $0x10] sm:$0xf]
        %v318 = vld [vmem:[%s1 + $0x14] sm:$0xf]
        %v319 = vld [vmem:[%s1 + $0x18] sm:$0xf]
        %v320 = vld [vmem:[%s1 + $0x1c] sm:$0xf]
        %v321 = vld [vmem:[%s1 + $0x20] sm:$0xf]
        %v322 = vld [vmem:[%s1 + $0x24] sm:$0xf]
        %v323 = vld [vmem:[%s1 + $0x28] sm:$0xf]
        %v324 = vld [vmem:[%s1 + $0x2c] sm:$0xf]
        %v325 = vld [vmem:[%s1 + $0x30] sm:$0xf]
        %v326 = vld [vmem:[%s1 + $0x34] sm:$0xf]
        %v327 = vld [vmem:[%s1 + $0x38] sm:$0xf]
        %v328 = vld [vmem:[%s1 + $0x3c] sm:$0xf]
        %v329 = vld [vmem:[%s2] sm:$0xff]
        %v330 = vld [vmem:[%s2 + $0x8] sm:$0xff]
        %v331 = vld [vmem:[%s2 + $0x10] sm:$0xff]
        %v332 = vld [vmem:[%s2 + $0x18] sm:$0xff]
        %v333 = vld [vmem:[%s2 + $0x20] sm:$0xff]
        %v334 = vld [vmem:[%s2 + $0x28] sm:$0xff]
        %v335 = vld [vmem:[%s2 + $0x30] sm:$0xff]
        %v336 = vld [vmem:[%s2 + $0x38] sm:$0xff]
        %v337 = vld [vmem:[%s2 + $0x40] sm:$0xff]
        %v338 = vld [vmem:[%s2 + $0x48] sm:$0xff]
        %v339 = vld [vmem:[%s2 + $0x50] sm:$0xff]
        %v340 = vld [vmem:[%s2 + $0x58] sm:$0xff]
        %v341 = vld [vmem:[%s2 + $0x60] sm:$0xff]
        %v342 = vld [vmem:[%s2 + $0x68] sm:$0xff]
        %v343 = vld [vmem:[%s2 + $0x70] sm:$0xff]
        %v344 = vld [vmem:[%s2 + $0x78] sm:$0xff]
        %346 = vset.pattern.permute.xlu0 0
        %347 = vperm.xlu0 %346, %v329
        %v348 = vpop.permute.xlu0 %347
        %351 = vset.pattern.permute.xlu0 0
        %352 = vperm.xlu0 %351, %v330
        %v353 = vpop.permute.xlu0 %352
        %356 = vset.pattern.permute.xlu0 0
        %357 = vperm.xlu0 %356, %v331
        %v358 = vpop.permute.xlu0 %357
        %361 = vset.pattern.permute.xlu0 0
        %362 = vperm.xlu0 %361, %v332
        %v363 = vpop.permute.xlu0 %362
        %366 = vset.pattern.permute.xlu0 0
        %367 = vperm.xlu0 %366, %v333
        %v368 = vpop.permute.xlu0 %367
        %371 = vset.pattern.permute.xlu0 0
        %372 = vperm.xlu0 %371, %v334
        %v373 = vpop.permute.xlu0 %372
        %376 = vset.pattern.permute.xlu0 0
        %377 = vperm.xlu0 %376, %v335
        %v378 = vpop.permute.xlu0 %377
        %381 = vset.pattern.permute.xlu0 0
        %382 = vperm.xlu0 %381, %v336
        %v383 = vpop.permute.xlu0 %382
        %386 = vset.pattern.permute.xlu0 0
        %387 = vperm.xlu0 %386, %v337
        %v388 = vpop.permute.xlu0 %387
        %391 = vset.pattern.permute.xlu0 0
        %392 = vperm.xlu0 %391, %v338
        %v393 = vpop.permute.xlu0 %392
        %396 = vset.pattern.permute.xlu0 0
        %397 = vperm.xlu0 %396, %v339
        %v398 = vpop.permute.xlu0 %397
        %401 = vset.pattern.permute.xlu0 0
        %402 = vperm.xlu0 %401, %v340
        %v403 = vpop.permute.xlu0 %402
        %406 = vset.pattern.permute.xlu0 0
        %407 = vperm.xlu0 %406, %v341
        %v408 = vpop.permute.xlu0 %407
        %411 = vset.pattern.permute.xlu0 0
        %412 = vperm.xlu0 %411, %v342
        %v413 = vpop.permute.xlu0 %412
        %416 = vset.pattern.permute.xlu0 0
        %417 = vperm.xlu0 %416, %v343
        %v418 = vpop.permute.xlu0 %417
        %421 = vset.pattern.permute.xlu0 0
        %422 = vperm.xlu0 %421, %v344
        %v423 = vpop.permute.xlu0 %422
        %v441 = vunpack.c.l.b16 %v313
        %v442 = vunpack.c.l.b16 %v314
        %v443 = vunpack.c.l.b16 %v315
        %v444 = vunpack.c.l.b16 %v316
        %v445 = vunpack.c.l.b16 %v317
        %v446 = vunpack.c.l.b16 %v318
        %v447 = vunpack.c.l.b16 %v319
        %v448 = vunpack.c.l.b16 %v320
        %v449 = vunpack.c.l.b16 %v321
        %v450 = vunpack.c.l.b16 %v322
        %v451 = vunpack.c.l.b16 %v323
        %v452 = vunpack.c.l.b16 %v324
        %v453 = vunpack.c.l.b16 %v325
        %v454 = vunpack.c.l.b16 %v326
        %v455 = vunpack.c.l.b16 %v327
        %v456 = vunpack.c.l.b16 %v328
        %v457 = vpack.c.b16 %v442, %v441
        %v458 = vpack.c.b16 %v444, %v443
        %v459 = vpack.c.b16 %v446, %v445
        %v460 = vpack.c.b16 %v448, %v447
        %v461 = vpack.c.b16 %v450, %v449
        %v462 = vpack.c.b16 %v452, %v451
        %v463 = vpack.c.b16 %v454, %v453
        %v464 = vpack.c.b16 %v456, %v455
        %vm465 = vcmask 64512
        %v467 = vsel %vm465, %v457, 0
        %v470 = vsel %vm465, %v458, 0
        %v473 = vsel %vm465, %v459, 0
        %v476 = vsel %vm465, %v460, 0
        %v479 = vsel %vm465, %v461, 0
        %v482 = vsel %vm465, %v462, 0
        %v485 = vsel %vm465, %v463, 0
        %v488 = vsel %vm465, %v464, 0
        %vm490 = vcmask 1043456
        %v492 = vsel %vm490, %v309, 0
        %v495 = vsel %vm490, %v310, 0
        %v498 = vsel %vm490, %v311, 0
        %v501 = vsel %vm490, %v312, 0
        %503 = vmatprep.subr.bf16.mxu0 %v495
        %504 = vmatpush1.bf16.msra.mxu0 %v492
        %505 = vmatprep.subr.bf16.mxu0 0
        %506 = vmatpush1.bf16.msra.mxu0 0
        %507 = vmatprep.subr.bf16.mxu0 0
        %508 = vmatpush1.bf16.msra.mxu0 0
        %509 = vmatprep.subr.bf16.mxu0 0
        %510 = vmatpush1.bf16.msra.mxu0 0
        %511 = vmatprep.subr.bf16.mxu0 0
        %512 = vmatpush1.bf16.msra.mxu0 0
        %513 = vmatprep.subr.bf16.mxu0 0
        %514 = vmatpush1.bf16.msra.mxu0 0
        %515 = vmatprep.subr.bf16.mxu0 0
        %516 = vmatpush1.bf16.msra.mxu0 0
        %517 = vmatprep.subr.bf16.mxu0 0
        %518 = vmatpush1.bf16.msra.mxu0 0
        %519 = vmatprep.subr.bf16.mxu0 0
        %520 = vmatpush1.bf16.msra.mxu0 0
        %521 = vmatprep.subr.bf16.mxu0 0
        %522 = vmatpush1.bf16.msra.mxu0 0
        %523 = vmatprep.subr.bf16.mxu0 0
        %524 = vmatpush1.bf16.msra.mxu0 0
        %525 = vmatprep.subr.bf16.mxu0 0
        %526 = vmatpush1.bf16.msra.mxu0 0
        %527 = vmatprep.subr.bf16.mxu0 0
        %528 = vmatpush1.bf16.msra.mxu0 0
        %529 = vmatprep.subr.bf16.mxu0 0
        %530 = vmatpush1.bf16.msra.mxu0 0
        %531 = vmatprep.subr.bf16.mxu0 0
        %532 = vmatpush1.bf16.msra.mxu0 0
        %533 = vmatprep.subr.bf16.mxu0 0
        %534 = vmatpush1.bf16.msra.mxu0 0
        %535 = vmatprep.mubr.bf16.mxu0 0
        %536 = vmatmul.mubr.bf16.gmra.mrb[0].mxu0 %v467
        %v537 = vpop.f32.mrb[0].mxu0
        %v538 = vadd.f32 %v348, %v537
        %v539 = vpop.f32.mrb[0].mxu0
        %v540 = vadd.f32 %v348, %v539
        %v541 = vpop.f32.mrb[0].mxu0
        %v542 = vadd.f32 %v353, %v541
        %v543 = vpop.f32.mrb[0].mxu0
        %v544 = vadd.f32 %v353, %v543
        %545 = vmatprep.mubr.bf16.mxu0 0
        %546 = vmatmul.mubr.bf16.gmra.mrb[0].mxu0 %v470
        %v547 = vpop.f32.mrb[0].mxu0
        %v548 = vadd.f32 %v358, %v547
        %v549 = vpop.f32.mrb[0].mxu0
        %v550 = vadd.f32 %v358, %v549
        %v551 = vpop.f32.mrb[0].mxu0
        %v552 = vadd.f32 %v363, %v551
        %v553 = vpop.f32.mrb[0].mxu0
        %v554 = vadd.f32 %v363, %v553
        %555 = vmatprep.mubr.bf16.mxu0 0
        %556 = vmatmul.mubr.bf16.gmra.mrb[0].mxu0 %v473
        %v557 = vpop.f32.mrb[0].mxu0
        %v558 = vadd.f32 %v368, %v557
        %v559 = vpop.f32.mrb[0].mxu0
        %v560 = vadd.f32 %v368, %v559
        %v561 = vpop.f32.mrb[0].mxu0
        %v562 = vadd.f32 %v373, %v561
        %v563 = vpop.f32.mrb[0].mxu0
        %v564 = vadd.f32 %v373, %v563
        %565 = vmatprep.mubr.bf16.mxu0 0
        %566 = vmatmul.mubr.bf16.gmra.mrb[0].mxu0 %v476
        %v567 = vpop.f32.mrb[0].mxu0
        %v568 = vadd.f32 %v378, %v567
        %v569 = vpop.f32.mrb[0].mxu0
        %v570 = vadd.f32 %v378, %v569
        %v571 = vpop.f32.mrb[0].mxu0
        %v572 = vadd.f32 %v383, %v571
        %v573 = vpop.f32.mrb[0].mxu0
        %v574 = vadd.f32 %v383, %v573
        %575 = vmatprep.mubr.bf16.mxu0 0
        %576 = vmatmul.mubr.bf16.gmra.mrb[0].mxu0 %v479
        %v577 = vpop.f32.mrb[0].mxu0
        %v578 = vadd.f32 %v388, %v577
        %v579 = vpop.f32.mrb[0].mxu0
        %v580 = vadd.f32 %v388, %v579
        %v581 = vpop.f32.mrb[0].mxu0
        %v582 = vadd.f32 %v393, %v581
        %v583 = vpop.f32.mrb[0].mxu0
        %v584 = vadd.f32 %v393, %v583
        %585 = vmatprep.mubr.bf16.mxu0 0
        %586 = vmatmul.mubr.bf16.gmra.mrb[0].mxu0 %v482
        %v587 = vpop.f32.mrb[0].mxu0
        %v588 = vadd.f32 %v398, %v587
        %v589 = vpop.f32.mrb[0].mxu0
        %v590 = vadd.f32 %v398, %v589
        %v591 = vpop.f32.mrb[0].mxu0
        %v592 = vadd.f32 %v403, %v591
        %v593 = vpop.f32.mrb[0].mxu0
        %v594 = vadd.f32 %v403, %v593
        %595 = vmatprep.mubr.bf16.mxu0 0
        %596 = vmatmul.mubr.bf16.gmra.mrb[0].mxu0 %v485
        %v597 = vpop.f32.mrb[0].mxu0
        %v598 = vadd.f32 %v408, %v597
        %v599 = vpop.f32.mrb[0].mxu0
        %v600 = vadd.f32 %v408, %v599
        %v601 = vpop.f32.mrb[0].mxu0
        %v602 = vadd.f32 %v413, %v601
        %v603 = vpop.f32.mrb[0].mxu0
        %v604 = vadd.f32 %v413, %v603
        %605 = vmatprep.mubr.bf16.mxu0 0
        %606 = vmatmul.mubr.bf16.gmra.mrb[0].mxu0 %v488
        %v607 = vpop.f32.mrb[0].mxu0
        %v608 = vadd.f32 %v418, %v607
        %v609 = vpop.f32.mrb[0].mxu0
        %v610 = vadd.f32 %v418, %v609
        %v611 = vpop.f32.mrb[0].mxu0
        %v612 = vadd.f32 %v423, %v611
        %v613 = vpop.f32.mrb[0].mxu0
        %v614 = vadd.f32 %v423, %v613
        %615 = vdwg.mxu0
        %616 = vmatprep.subr.bf16.mxu0 %v501
        %617 = vmatpush1.bf16.msra.mxu0 %v498
        %618 = vmatprep.subr.bf16.mxu0 0
        %619 = vmatpush1.bf16.msra.mxu0 0
        %620 = vmatprep.subr.bf16.mxu0 0
        %621 = vmatpush1.bf16.msra.mxu0 0
        %622 = vmatprep.subr.bf16.mxu0 0
        %623 = vmatpush1.bf16.msra.mxu0 0
        %624 = vmatprep.subr.bf16.mxu0 0
        %625 = vmatpush1.bf16.msra.mxu0 0
        %626 = vmatprep.subr.bf16.mxu0 0
        %627 = vmatpush1.bf16.msra.mxu0 0
        %628 = vmatprep.subr.bf16.mxu0 0
        %629 = vmatpush1.bf16.msra.mxu0 0
        %630 = vmatprep.subr.bf16.mxu0 0
        %631 = vmatpush1.bf16.msra.mxu0 0
        %632 = vmatprep.subr.bf16.mxu0 0
        %633 = vmatpush1.bf16.msra.mxu0 0
        %634 = vmatprep.subr.bf16.mxu0 0
        %635 = vmatpush1.bf16.msra.mxu0 0
        %636 = vmatprep.subr.bf16.mxu0 0
        %637 = vmatpush1.bf16.msra.mxu0 0
        %638 = vmatprep.subr.bf16.mxu0 0
        %639 = vmatpush1.bf16.msra.mxu0 0
        %640 = vmatprep.subr.bf16.mxu0 0
        %641 = vmatpush1.bf16.msra.mxu0 0
        %642 = vmatprep.subr.bf16.mxu0 0
        %643 = vmatpush1.bf16.msra.mxu0 0
        %644 = vmatprep.subr.bf16.mxu0 0
        %645 = vmatpush1.bf16.msra.mxu0 0
        %646 = vmatprep.subr.bf16.mxu0 0
        %647 = vmatpush1.bf16.msra.mxu0 0
        %648 = vmatprep.mubr.bf16.mxu0 0
        %649 = vmatmul.mubr.bf16.gmra.mrb[0].mxu0 %v467
        %v650 = vpop.f32.mrb[0].mxu0
        %v651 = vadd.f32 %v348, %v650
        %v652 = vpop.f32.mrb[0].mxu0
        %v653 = vadd.f32 %v348, %v652
        %v654 = vpop.f32.mrb[0].mxu0
        %v655 = vadd.f32 %v353, %v654
        %v656 = vpop.f32.mrb[0].mxu0
        %v657 = vadd.f32 %v353, %v656
        %658 = vmatprep.mubr.bf16.mxu0 0
        %659 = vmatmul.mubr.bf16.gmra.mrb[0].mxu0 %v470
        %v660 = vpop.f32.mrb[0].mxu0
        %v661 = vadd.f32 %v358, %v660
        %v662 = vpop.f32.mrb[0].mxu0
        %v663 = vadd.f32 %v358, %v662
        %v664 = vpop.f32.mrb[0].mxu0
        %v665 = vadd.f32 %v363, %v664
        %v666 = vpop.f32.mrb[0].mxu0
        %v667 = vadd.f32 %v363, %v666
        %668 = vmatprep.mubr.bf16.mxu0 0
        %669 = vmatmul.mubr.bf16.gmra.mrb[0].mxu0 %v473
        %v670 = vpop.f32.mrb[0].mxu0
        %v671 = vadd.f32 %v368, %v670
        %v672 = vpop.f32.mrb[0].mxu0
        %v673 = vadd.f32 %v368, %v672
        %v674 = vpop.f32.mrb[0].mxu0
        %v675 = vadd.f32 %v373, %v674
        %v676 = vpop.f32.mrb[0].mxu0
        %v677 = vadd.f32 %v373, %v676
        %678 = vmatprep.mubr.bf16.mxu0 0
        %679 = vmatmul.mubr.bf16.gmra.mrb[0].mxu0 %v476
        %v680 = vpop.f32.mrb[0].mxu0
        %v681 = vadd.f32 %v378, %v680
        %v682 = vpop.f32.mrb[0].mxu0
        %v683 = vadd.f32 %v378, %v682
        %v684 = vpop.f32.mrb[0].mxu0
        %v685 = vadd.f32 %v383, %v684
        %v686 = vpop.f32.mrb[0].mxu0
        %v687 = vadd.f32 %v383, %v686
        %688 = vmatprep.mubr.bf16.mxu0 0
        %689 = vmatmul.mubr.bf16.gmra.mrb[0].mxu0 %v479
        %v690 = vpop.f32.mrb[0].mxu0
        %v691 = vadd.f32 %v388, %v690
        %v692 = vpop.f32.mrb[0].mxu0
        %v693 = vadd.f32 %v388, %v692
        %v694 = vpop.f32.mrb[0].mxu0
        %v695 = vadd.f32 %v393, %v694
        %v696 = vpop.f32.mrb[0].mxu0
        %v697 = vadd.f32 %v393, %v696
        %698 = vmatprep.mubr.bf16.mxu0 0
        %699 = vmatmul.mubr.bf16.gmra.mrb[0].mxu0 %v482
        %v700 = vpop.f32.mrb[0].mxu0
        %v701 = vadd.f32 %v398, %v700
        %v702 = vpop.f32.mrb[0].mxu0
        %v703 = vadd.f32 %v398, %v702
        %v704 = vpop.f32.mrb[0].mxu0
        %v705 = vadd.f32 %v403, %v704
        %v706 = vpop.f32.mrb[0].mxu0
        %v707 = vadd.f32 %v403, %v706
        %708 = vmatprep.mubr.bf16.mxu0 0
        %709 = vmatmul.mubr.bf16.gmra.mrb[0].mxu0 %v485
        %v710 = vpop.f32.mrb[0].mxu0
        %v711 = vadd.f32 %v408, %v710
        %v712 = vpop.f32.mrb[0].mxu0
        %v713 = vadd.f32 %v408, %v712
        %v714 = vpop.f32.mrb[0].mxu0
        %v715 = vadd.f32 %v413, %v714
        %v716 = vpop.f32.mrb[0].mxu0
        %v717 = vadd.f32 %v413, %v716
        %718 = vmatprep.mubr.bf16.mxu0 0
        %719 = vmatmul.mubr.bf16.gmra.mrb[0].mxu0 %v488
        %v720 = vpop.f32.mrb[0].mxu0
        %v721 = vadd.f32 %v418, %v720
        %v722 = vpop.f32.mrb[0].mxu0
        %v723 = vadd.f32 %v418, %v722
        %v724 = vpop.f32.mrb[0].mxu0
        %v725 = vadd.f32 %v423, %v724
        %v726 = vpop.f32.mrb[0].mxu0
        %v727 = vadd.f32 %v423, %v726
        %728 = vdwg.mxu0
        %v729 = vmax.f32 %v538, 0.0
        %v730 = vmax.f32 %v540, 0.0
        %v731 = vmax.f32 %v651, 0.0
        %v732 = vmax.f32 %v653, 0.0
        %v733 = vmax.f32 %v542, 0.0
        %v734 = vmax.f32 %v544, 0.0
        %v735 = vmax.f32 %v655, 0.0
        %v736 = vmax.f32 %v657, 0.0
        %v737 = vmax.f32 %v548, 0.0
        %v738 = vmax.f32 %v550, 0.0
        %v739 = vmax.f32 %v661, 0.0
        %v740 = vmax.f32 %v663, 0.0
        %v741 = vmax.f32 %v552, 0.0
        %v742 = vmax.f32 %v554, 0.0
        %v743 = vmax.f32 %v665, 0.0
        %v744 = vmax.f32 %v667, 0.0
        %v745 = vmax.f32 %v558, 0.0
        %v746 = vmax.f32 %v560, 0.0
        %v747 = vmax.f32 %v671, 0.0
        %v748 = vmax.f32 %v673, 0.0
        %v749 = vmax.f32 %v562, 0.0
        %v750 = vmax.f32 %v564, 0.0
        %v751 = vmax.f32 %v675, 0.0
        %v752 = vmax.f32 %v677, 0.0
        %v753 = vmax.f32 %v568, 0.0
        %v754 = vmax.f32 %v570, 0.0
        %v755 = vmax.f32 %v681, 0.0
        %v756 = vmax.f32 %v683, 0.0
        %v757 = vmax.f32 %v572, 0.0
        %v758 = vmax.f32 %v574, 0.0
        %v759 = vmax.f32 %v685, 0.0
        %v760 = vmax.f32 %v687, 0.0
        %v761 = vmax.f32 %v578, 0.0
        %v762 = vmax.f32 %v580, 0.0
        %v763 = vmax.f32 %v691, 0.0
        %v764 = vmax.f32 %v693, 0.0
        %v765 = vmax.f32 %v582, 0.0
        %v766 = vmax.f32 %v584, 0.0
        %v767 = vmax.f32 %v695, 0.0
        %v768 = vmax.f32 %v697, 0.0
        %v769 = vmax.f32 %v588, 0.0
        %v770 = vmax.f32 %v590, 0.0
        %v771 = vmax.f32 %v701, 0.0
        %v772 = vmax.f32 %v703, 0.0
        %v773 = vmax.f32 %v592, 0.0
        %v774 = vmax.f32 %v594, 0.0
        %v775 = vmax.f32 %v705, 0.0
        %v776 = vmax.f32 %v707, 0.0
        %v777 = vmax.f32 %v598, 0.0
        %v778 = vmax.f32 %v600, 0.0
        %v779 = vmax.f32 %v711, 0.0
        %v780 = vmax.f32 %v713, 0.0
        %v781 = vmax.f32 %v602, 0.0
        %v782 = vmax.f32 %v604, 0.0
        %v783 = vmax.f32 %v715, 0.0
        %v784 = vmax.f32 %v717, 0.0
        %v785 = vmax.f32 %v608, 0.0
        %v786 = vmax.f32 %v610, 0.0
        %v787 = vmax.f32 %v721, 0.0
        %v788 = vmax.f32 %v723, 0.0
        %v789 = vmax.f32 %v612, 0.0
        %v790 = vmax.f32 %v614, 0.0
        %v791 = vmax.f32 %v725, 0.0
        %v792 = vmax.f32 %v727, 0.0
        %v793 = vpack.c.bf16 %v733, %v729
        %v794 = vpack.c.bf16 %v734, %v730
        %v795 = vpack.c.bf16 %v735, %v731
        %v796 = vpack.c.bf16 %v736, %v732
        %v797 = vpack.c.bf16 %v741, %v737
        %v798 = vpack.c.bf16 %v742, %v738
        %v799 = vpack.c.bf16 %v743, %v739
        %v800 = vpack.c.bf16 %v744, %v740
        %v801 = vpack.c.bf16 %v749, %v745
        %v802 = vpack.c.bf16 %v750, %v746
        %v803 = vpack.c.bf16 %v751, %v747
        %v804 = vpack.c.bf16 %v752, %v748
        %v805 = vpack.c.bf16 %v757, %v753
        %v806 = vpack.c.bf16 %v758, %v754
        %v807 = vpack.c.bf16 %v759, %v755
        %v808 = vpack.c.bf16 %v760, %v756
        %v809 = vpack.c.bf16 %v765, %v761
        %v810 = vpack.c.bf16 %v766, %v762
        %v811 = vpack.c.bf16 %v767, %v763
        %v812 = vpack.c.bf16 %v768, %v764
        %v813 = vpack.c.bf16 %v773, %v769
        %v814 = vpack.c.bf16 %v774, %v770
        %v815 = vpack.c.bf16 %v775, %v771
        %v816 = vpack.c.bf16 %v776, %v772
        %v817 = vpack.c.bf16 %v781, %v777
        %v818 = vpack.c.bf16 %v782, %v778
        %v819 = vpack.c.bf16 %v783, %v779
        %v820 = vpack.c.bf16 %v784, %v780
        %v821 = vpack.c.bf16 %v789, %v785
        %v822 = vpack.c.bf16 %v790, %v786
        %v823 = vpack.c.bf16 %v791, %v787
        %v824 = vpack.c.bf16 %v792, %v788
        %825 = vst [vmem:[#allocation2] sm:$0xff] %v793
        %826 = vst [vmem:[#allocation2 + $0x8] sm:$0xff] %v794
        %827 = vst [vmem:[#allocation2 + $0x10] sm:$0xff] %v795
        %828 = vst [vmem:[#allocation2 + $0x18] sm:$0xff] %v796
        %829 = vst [vmem:[#allocation2 + $0x20] sm:$0xff] %v797
        %830 = vst [vmem:[#allocation2 + $0x28] sm:$0xff] %v798
        %831 = vst [vmem:[#allocation2 + $0x30] sm:$0xff] %v799
        %832 = vst [vmem:[#allocation2 + $0x38] sm:$0xff] %v800
        %833 = vst [vmem:[#allocation2 + $0x40] sm:$0xff] %v801
        %834 = vst [vmem:[#allocation2 + $0x48] sm:$0xff] %v802
        %835 = vst [vmem:[#allocation2 + $0x50] sm:$0xff] %v803
        %836 = vst [vmem:[#allocation2 + $0x58] sm:$0xff] %v804
        %837 = vst [vmem:[#allocation2 + $0x60] sm:$0xff] %v805
        %838 = vst [vmem:[#allocation2 + $0x68] sm:$0xff] %v806
        %839 = vst [vmem:[#allocation2 + $0x70] sm:$0xff] %v807
        %840 = vst [vmem:[#allocation2 + $0x78] sm:$0xff] %v808
        %841 = vst [vmem:[#allocation2 + $0x80] sm:$0xff] %v809
        %842 = vst [vmem:[#allocation2 + $0x88] sm:$0xff] %v810
        %843 = vst [vmem:[#allocation2 + $0x90] sm:$0xff] %v811
        %844 = vst [vmem:[#allocation2 + $0x98] sm:$0xff] %v812
        %845 = vst [vmem:[#allocation2 + $0xa0] sm:$0xff] %v813
        %846 = vst [vmem:[#allocation2 + $0xa8] sm:$0xff] %v814
        %847 = vst [vmem:[#allocation2 + $0xb0] sm:$0xff] %v815
        %848 = vst [vmem:[#allocation2 + $0xb8] sm:$0xff] %v816
        %849 = vst [vmem:[#allocation2 + $0xc0] sm:$0xff] %v817
        %850 = vst [vmem:[#allocation2 + $0xc8] sm:$0xff] %v818
        %851 = vst [vmem:[#allocation2 + $0xd0] sm:$0xff] %v819
        %852 = vst [vmem:[#allocation2 + $0xd8] sm:$0xff] %v820
        %853 = vst [vmem:[#allocation2 + $0xe0] sm:$0xff] %v821
        %854 = vst [vmem:[#allocation2 + $0xe8] sm:$0xff] %v822
        %855 = vst [vmem:[#allocation2 + $0xf0] sm:$0xff] %v823
        %856 = vst [vmem:[#allocation2 + $0xf8] sm:$0xff] %v824
        %v857 = vld [vmem:[#allocation2] sm:$0xff]
        %v858 = vld [vmem:[#allocation2 + $0x8] sm:$0xff]
        %v859 = vld [vmem:[#allocation2 + $0x10] sm:$0xff]
        %v860 = vld [vmem:[#allocation2 + $0x18] sm:$0xff]
        %v861 = vld [vmem:[#allocation2 + $0x20] sm:$0xff]
        %v862 = vld [vmem:[#allocation2 + $0x28] sm:$0xff]
        %v863 = vld [vmem:[#allocation2 + $0x30] sm:$0xff]
        %v864 = vld [vmem:[#allocation2 + $0x38] sm:$0xff]
        %v865 = vld [vmem:[#allocation2 + $0x40] sm:$0xff]
        %v866 = vld [vmem:[#allocation2 + $0x48] sm:$0xff]
        %v867 = vld [vmem:[#allocation2 + $0x50] sm:$0xff]
        %v868 = vld [vmem:[#allocation2 + $0x58] sm:$0xff]
        %v869 = vld [vmem:[#allocation2 + $0x60] sm:$0xff]
        %v870 = vld [vmem:[#allocation2 + $0x68] sm:$0xff]
        %v871 = vld [vmem:[#allocation2 + $0x70] sm:$0xff]
        %v872 = vld [vmem:[#allocation2 + $0x78] sm:$0xff]
        %v873 = vld [vmem:[#allocation2 + $0x80] sm:$0xff]
        %v874 = vld [vmem:[#allocation2 + $0x88] sm:$0xff]
        %v875 = vld [vmem:[#allocation2 + $0x90] sm:$0xff]
        %v876 = vld [vmem:[#allocation2 + $0x98] sm:$0xff]
        %v877 = vld [vmem:[#allocation2 + $0xa0] sm:$0xff]
        %v878 = vld [vmem:[#allocation2 + $0xa8] sm:$0xff]
        %v879 = vld [vmem:[#allocation2 + $0xb0] sm:$0xff]
        %v880 = vld [vmem:[#allocation2 + $0xb8] sm:$0xff]
        %v881 = vld [vmem:[#allocation2 + $0xc0] sm:$0xff]
        %v882 = vld [vmem:[#allocation2 + $0xc8] sm:$0xff]
        %v883 = vld [vmem:[#allocation2 + $0xd0] sm:$0xff]
        %v884 = vld [vmem:[#allocation2 + $0xd8] sm:$0xff]
        %v885 = vld [vmem:[#allocation2 + $0xe0] sm:$0xff]
        %v886 = vld [vmem:[#allocation2 + $0xe8] sm:$0xff]
        %v887 = vld [vmem:[#allocation2 + $0xf0] sm:$0xff]
        %v888 = vld [vmem:[#allocation2 + $0xf8] sm:$0xff]
        %v889 = vld [vmem:[%s3] sm:$0xf]
        %v890 = vld [vmem:[%s3 + $0x4] sm:$0xf]
        %v891 = vld [vmem:[%s3 + $0x8] sm:$0xf]
        %v892 = vld [vmem:[%s3 + $0xc] sm:$0xf]
        %v893 = vld [vmem:[%s3 + $0x10] sm:$0xf]
        %v894 = vld [vmem:[%s3 + $0x14] sm:$0xf]
        %v895 = vld [vmem:[%s3 + $0x18] sm:$0xf]
        %v896 = vld [vmem:[%s3 + $0x1c] sm:$0xf]
        %v897 = vld [vmem:[%s3 + $0x20] sm:$0xf]
        %v898 = vld [vmem:[%s3 + $0x24] sm:$0xf]
        %v899 = vld [vmem:[%s3 + $0x28] sm:$0xf]
        %v900 = vld [vmem:[%s3 + $0x2c] sm:$0xf]
        %v901 = vld [vmem:[%s3 + $0x30] sm:$0xf]
        %v902 = vld [vmem:[%s3 + $0x34] sm:$0xf]
        %v903 = vld [vmem:[%s3 + $0x38] sm:$0xf]
        %v904 = vld [vmem:[%s3 + $0x3c] sm:$0xf]
        %v905 = vld [vmem:[%s4] sm:$0xff]
        %v906 = vld [vmem:[%s4 + $0x8] sm:$0xff]
        %v907 = vld [vmem:[%s4 + $0x10] sm:$0xff]
        %v908 = vld [vmem:[%s4 + $0x18] sm:$0xff]
        %v909 = vld [vmem:[%s4 + $0x20] sm:$0xff]
        %v910 = vld [vmem:[%s4 + $0x28] sm:$0xff]
        %v911 = vld [vmem:[%s4 + $0x30] sm:$0xff]
        %v912 = vld [vmem:[%s4 + $0x38] sm:$0xff]
        %v913 = vld [vmem:[%s4 + $0x40] sm:$0xff]
        %v914 = vld [vmem:[%s4 + $0x48] sm:$0xff]
        %v915 = vld [vmem:[%s4 + $0x50] sm:$0xff]
        %v916 = vld [vmem:[%s4 + $0x58] sm:$0xff]
        %v917 = vld [vmem:[%s4 + $0x60] sm:$0xff]
        %v918 = vld [vmem:[%s4 + $0x68] sm:$0xff]
        %v919 = vld [vmem:[%s4 + $0x70] sm:$0xff]
        %v920 = vld [vmem:[%s4 + $0x78] sm:$0xff]
        %922 = vset.pattern.permute.xlu0 0
        %923 = vperm.xlu0 %922, %v905
        %v924 = vpop.permute.xlu0 %923
        %927 = vset.pattern.permute.xlu0 0
        %928 = vperm.xlu0 %927, %v906
        %v929 = vpop.permute.xlu0 %928
        %932 = vset.pattern.permute.xlu0 0
        %933 = vperm.xlu0 %932, %v907
        %v934 = vpop.permute.xlu0 %933
        %937 = vset.pattern.permute.xlu0 0
        %938 = vperm.xlu0 %937, %v908
        %v939 = vpop.permute.xlu0 %938
        %942 = vset.pattern.permute.xlu0 0
        %943 = vperm.xlu0 %942, %v909
        %v944 = vpop.permute.xlu0 %943
        %947 = vset.pattern.permute.xlu0 0
        %948 = vperm.xlu0 %947, %v910
        %v949 = vpop.permute.xlu0 %948
        %952 = vset.pattern.permute.xlu0 0
        %953 = vperm.xlu0 %952, %v911
        %v954 = vpop.permute.xlu0 %953
        %957 = vset.pattern.permute.xlu0 0
        %958 = vperm.xlu0 %957, %v912
        %v959 = vpop.permute.xlu0 %958
        %962 = vset.pattern.permute.xlu0 0
        %963 = vperm.xlu0 %962, %v913
        %v964 = vpop.permute.xlu0 %963
        %967 = vset.pattern.permute.xlu0 0
        %968 = vperm.xlu0 %967, %v914
        %v969 = vpop.permute.xlu0 %968
        %972 = vset.pattern.permute.xlu0 0
        %973 = vperm.xlu0 %972, %v915
        %v974 = vpop.permute.xlu0 %973
        %977 = vset.pattern.permute.xlu0 0
        %978 = vperm.xlu0 %977, %v916
        %v979 = vpop.permute.xlu0 %978
        %982 = vset.pattern.permute.xlu0 0
        %983 = vperm.xlu0 %982, %v917
        %v984 = vpop.permute.xlu0 %983
        %987 = vset.pattern.permute.xlu0 0
        %988 = vperm.xlu0 %987, %v918
        %v989 = vpop.permute.xlu0 %988
        %992 = vset.pattern.permute.xlu0 0
        %993 = vperm.xlu0 %992, %v919
        %v994 = vpop.permute.xlu0 %993
        %997 = vset.pattern.permute.xlu0 0
        %998 = vperm.xlu0 %997, %v920
        %v999 = vpop.permute.xlu0 %998
        %v1017 = vunpack.c.l.b16 %v889
        %v1018 = vunpack.c.l.b16 %v890
        %v1019 = vunpack.c.l.b16 %v891
        %v1020 = vunpack.c.l.b16 %v892
        %v1021 = vunpack.c.l.b16 %v893
        %v1022 = vunpack.c.l.b16 %v894
        %v1023 = vunpack.c.l.b16 %v895
        %v1024 = vunpack.c.l.b16 %v896
        %v1025 = vunpack.c.l.b16 %v897
        %v1026 = vunpack.c.l.b16 %v898
        %v1027 = vunpack.c.l.b16 %v899
        %v1028 = vunpack.c.l.b16 %v900
        %v1029 = vunpack.c.l.b16 %v901
        %v1030 = vunpack.c.l.b16 %v902
        %v1031 = vunpack.c.l.b16 %v903
        %v1032 = vunpack.c.l.b16 %v904
        %v1033 = vpack.c.b16 %v1018, %v1017
        %v1034 = vpack.c.b16 %v1020, %v1019
        %v1035 = vpack.c.b16 %v1022, %v1021
        %v1036 = vpack.c.b16 %v1024, %v1023
        %v1037 = vpack.c.b16 %v1026, %v1025
        %v1038 = vpack.c.b16 %v1028, %v1027
        %v1039 = vpack.c.b16 %v1030, %v1029
        %v1040 = vpack.c.b16 %v1032, %v1031
        %1049 = vmatprep.subr.bf16.mxu0 %v858
        %1050 = vmatpush1.bf16.msra.mxu0 %v857
        %1051 = vmatprep.subr.bf16.mxu0 %v862
        %1052 = vmatpush1.bf16.msra.mxu0 %v861
        %1053 = vmatprep.subr.bf16.mxu0 %v866
        %1054 = vmatpush1.bf16.msra.mxu0 %v865
        %1055 = vmatprep.subr.bf16.mxu0 %v870
        %1056 = vmatpush1.bf16.msra.mxu0 %v869
        %1057 = vmatprep.subr.bf16.mxu0 %v874
        %1058 = vmatpush1.bf16.msra.mxu0 %v873
        %1059 = vmatprep.subr.bf16.mxu0 %v878
        %1060 = vmatpush1.bf16.msra.mxu0 %v877
        %1061 = vmatprep.subr.bf16.mxu0 %v882
        %1062 = vmatpush1.bf16.msra.mxu0 %v881
        %1063 = vmatprep.subr.bf16.mxu0 %v886
        %1064 = vmatpush1.bf16.msra.mxu0 %v885
        %1065 = vmatprep.subr.bf16.mxu0 0
        %1066 = vmatpush1.bf16.msra.mxu0 0
        %1067 = vmatprep.subr.bf16.mxu0 0
        %1068 = vmatpush1.bf16.msra.mxu0 0
        %1069 = vmatprep.subr.bf16.mxu0 0
        %1070 = vmatpush1.bf16.msra.mxu0 0
        %1071 = vmatprep.subr.bf16.mxu0 0
        %1072 = vmatpush1.bf16.msra.mxu0 0
        %1073 = vmatprep.subr.bf16.mxu0 0
        %1074 = vmatpush1.bf16.msra.mxu0 0
        %1075 = vmatprep.subr.bf16.mxu0 0
        %1076 = vmatpush1.bf16.msra.mxu0 0
        %1077 = vmatprep.subr.bf16.mxu0 0
        %1078 = vmatpush1.bf16.msra.mxu0 0
        %1079 = vmatprep.subr.bf16.mxu0 0
        %1080 = vmatpush1.bf16.msra.mxu0 0
        %1081 = vmatprep.mubr.bf16.mxu0 0
        %1082 = vmatmul.mubr.bf16.gmra.mrb[0].mxu0 %v1033
        %v1083 = vpop.f32.mrb[0].mxu0
        %v1084 = vadd.f32 %v924, %v1083
        %v1085 = vpop.f32.mrb[0].mxu0
        %v1086 = vadd.f32 %v924, %v1085
        %v1087 = vpop.f32.mrb[0].mxu0
        %v1088 = vadd.f32 %v929, %v1087
        %v1089 = vpop.f32.mrb[0].mxu0
        %v1090 = vadd.f32 %v929, %v1089
        %1091 = vmatprep.mubr.bf16.mxu0 0
        %1092 = vmatmul.mubr.bf16.gmra.mrb[0].mxu0 %v1034
        %v1093 = vpop.f32.mrb[0].mxu0
        %v1094 = vadd.f32 %v934, %v1093
        %v1095 = vpop.f32.mrb[0].mxu0
        %v1096 = vadd.f32 %v934, %v1095
        %v1097 = vpop.f32.mrb[0].mxu0
        %v1098 = vadd.f32 %v939, %v1097
        %v1099 = vpop.f32.mrb[0].mxu0
        %v1100 = vadd.f32 %v939, %v1099
        %1101 = vmatprep.mubr.bf16.mxu0 0
        %1102 = vmatmul.mubr.bf16.gmra.mrb[0].mxu0 %v1035
        %v1103 = vpop.f32.mrb[0].mxu0
        %v1104 = vadd.f32 %v944, %v1103
        %v1105 = vpop.f32.mrb[0].mxu0
        %v1106 = vadd.f32 %v944, %v1105
        %v1107 = vpop.f32.mrb[0].mxu0
        %v1108 = vadd.f32 %v949, %v1107
        %v1109 = vpop.f32.mrb[0].mxu0
        %v1110 = vadd.f32 %v949, %v1109
        %1111 = vmatprep.mubr.bf16.mxu0 0
        %1112 = vmatmul.mubr.bf16.gmra.mrb[0].mxu0 %v1036
        %v1113 = vpop.f32.mrb[0].mxu0
        %v1114 = vadd.f32 %v954, %v1113
        %v1115 = vpop.f32.mrb[0].mxu0
        %v1116 = vadd.f32 %v954, %v1115
        %v1117 = vpop.f32.mrb[0].mxu0
        %v1118 = vadd.f32 %v959, %v1117
        %v1119 = vpop.f32.mrb[0].mxu0
        %v1120 = vadd.f32 %v959, %v1119
        %1121 = vmatprep.mubr.bf16.mxu0 0
        %1122 = vmatmul.mubr.bf16.gmra.mrb[0].mxu0 %v1037
        %v1123 = vpop.f32.mrb[0].mxu0
        %v1124 = vadd.f32 %v964, %v1123
        %v1125 = vpop.f32.mrb[0].mxu0
        %v1126 = vadd.f32 %v964, %v1125
        %v1127 = vpop.f32.mrb[0].mxu0
        %v1128 = vadd.f32 %v969, %v1127
        %v1129 = vpop.f32.mrb[0].mxu0
        %v1130 = vadd.f32 %v969, %v1129
        %1131 = vmatprep.mubr.bf16.mxu0 0
        %1132 = vmatmul.mubr.bf16.gmra.mrb[0].mxu0 %v1038
        %v1133 = vpop.f32.mrb[0].mxu0
        %v1134 = vadd.f32 %v974, %v1133
        %v1135 = vpop.f32.mrb[0].mxu0
        %v1136 = vadd.f32 %v974, %v1135
        %v1137 = vpop.f32.mrb[0].mxu0
        %v1138 = vadd.f32 %v979, %v1137
        %v1139 = vpop.f32.mrb[0].mxu0
        %v1140 = vadd.f32 %v979, %v1139
        %1141 = vmatprep.mubr.bf16.mxu0 0
        %1142 = vmatmul.mubr.bf16.gmra.mrb[0].mxu0 %v1039
        %v1143 = vpop.f32.mrb[0].mxu0
        %v1144 = vadd.f32 %v984, %v1143
        %v1145 = vpop.f32.mrb[0].mxu0
        %v1146 = vadd.f32 %v984, %v1145
        %v1147 = vpop.f32.mrb[0].mxu0
        %v1148 = vadd.f32 %v989, %v1147
        %v1149 = vpop.f32.mrb[0].mxu0
        %v1150 = vadd.f32 %v989, %v1149
        %1151 = vmatprep.mubr.bf16.mxu0 0
        %1152 = vmatmul.mubr.bf16.gmra.mrb[0].mxu0 %v1040
        %v1153 = vpop.f32.mrb[0].mxu0
        %v1154 = vadd.f32 %v994, %v1153
        %v1155 = vpop.f32.mrb[0].mxu0
        %v1156 = vadd.f32 %v994, %v1155
        %v1157 = vpop.f32.mrb[0].mxu0
        %v1158 = vadd.f32 %v999, %v1157
        %v1159 = vpop.f32.mrb[0].mxu0
        %v1160 = vadd.f32 %v999, %v1159
        %1161 = vdwg.mxu0
        %1162 = vmatprep.subr.bf16.mxu0 %v860
        %1163 = vmatpush1.bf16.msra.mxu0 %v859
        %1164 = vmatprep.subr.bf16.mxu0 %v864
        %1165 = vmatpush1.bf16.msra.mxu0 %v863
        %1166 = vmatprep.subr.bf16.mxu0 %v868
        %1167 = vmatpush1.bf16.msra.mxu0 %v867
        %1168 = vmatprep.subr.bf16.mxu0 %v872
        %1169 = vmatpush1.bf16.msra.mxu0 %v871
        %1170 = vmatprep.subr.bf16.mxu0 %v876
        %1171 = vmatpush1.bf16.msra.mxu0 %v875
        %1172 = vmatprep.subr.bf16.mxu0 %v880
        %1173 = vmatpush1.bf16.msra.mxu0 %v879
        %1174 = vmatprep.subr.bf16.mxu0 %v884
        %1175 = vmatpush1.bf16.msra.mxu0 %v883
        %1176 = vmatprep.subr.bf16.mxu0 %v888
        %1177 = vmatpush1.bf16.msra.mxu0 %v887
        %1178 = vmatprep.subr.bf16.mxu0 0
        %1179 = vmatpush1.bf16.msra.mxu0 0
        %1180 = vmatprep.subr.bf16.mxu0 0
        %1181 = vmatpush1.bf16.msra.mxu0 0
        %1182 = vmatprep.subr.bf16.mxu0 0
        %1183 = vmatpush1.bf16.msra.mxu0 0
        %1184 = vmatprep.subr.bf16.mxu0 0
        %1185 = vmatpush1.bf16.msra.mxu0 0
        %1186 = vmatprep.subr.bf16.mxu0 0
        %1187 = vmatpush1.bf16.msra.mxu0 0
        %1188 = vmatprep.subr.bf16.mxu0 0
        %1189 = vmatpush1.bf16.msra.mxu0 0
        %1190 = vmatprep.subr.bf16.mxu0 0
        %1191 = vmatpush1.bf16.msra.mxu0 0
        %1192 = vmatprep.subr.bf16.mxu0 0
        %1193 = vmatpush1.bf16.msra.mxu0 0
        %1194 = vmatprep.mubr.bf16.mxu0 0
        %1195 = vmatmul.mubr.bf16.gmra.mrb[0].mxu0 %v1033
        %v1196 = vpop.f32.mrb[0].mxu0
        %v1197 = vadd.f32 %v924, %v1196
        %v1198 = vpop.f32.mrb[0].mxu0
        %v1199 = vadd.f32 %v924, %v1198
        %v1200 = vpop.f32.mrb[0].mxu0
        %v1201 = vadd.f32 %v929, %v1200
        %v1202 = vpop.f32.mrb[0].mxu0
        %v1203 = vadd.f32 %v929, %v1202
        %1204 = vmatprep.mubr.bf16.mxu0 0
        %1205 = vmatmul.mubr.bf16.gmra.mrb[0].mxu0 %v1034
        %v1206 = vpop.f32.mrb[0].mxu0
        %v1207 = vadd.f32 %v934, %v1206
        %v1208 = vpop.f32.mrb[0].mxu0
        %v1209 = vadd.f32 %v934, %v1208
        %v1210 = vpop.f32.mrb[0].mxu0
        %v1211 = vadd.f32 %v939, %v1210
        %v1212 = vpop.f32.mrb[0].mxu0
        %v1213 = vadd.f32 %v939, %v1212
        %1214 = vmatprep.mubr.bf16.mxu0 0
        %1215 = vmatmul.mubr.bf16.gmra.mrb[0].mxu0 %v1035
        %v1216 = vpop.f32.mrb[0].mxu0
        %v1217 = vadd.f32 %v944, %v1216
        %v1218 = vpop.f32.mrb[0].mxu0
        %v1219 = vadd.f32 %v944, %v1218
        %v1220 = vpop.f32.mrb[0].mxu0
        %v1221 = vadd.f32 %v949, %v1220
        %v1222 = vpop.f32.mrb[0].mxu0
        %v1223 = vadd.f32 %v949, %v1222
        %1224 = vmatprep.mubr.bf16.mxu0 0
        %1225 = vmatmul.mubr.bf16.gmra.mrb[0].mxu0 %v1036
        %v1226 = vpop.f32.mrb[0].mxu0
        %v1227 = vadd.f32 %v954, %v1226
        %v1228 = vpop.f32.mrb[0].mxu0
        %v1229 = vadd.f32 %v954, %v1228
        %v1230 = vpop.f32.mrb[0].mxu0
        %v1231 = vadd.f32 %v959, %v1230
        %v1232 = vpop.f32.mrb[0].mxu0
        %v1233 = vadd.f32 %v959, %v1232
        %1234 = vmatprep.mubr.bf16.mxu0 0
        %1235 = vmatmul.mubr.bf16.gmra.mrb[0].mxu0 %v1037
        %v1236 = vpop.f32.mrb[0].mxu0
        %v1237 = vadd.f32 %v964, %v1236
        %v1238 = vpop.f32.mrb[0].mxu0
        %v1239 = vadd.f32 %v964, %v1238
        %v1240 = vpop.f32.mrb[0].mxu0
        %v1241 = vadd.f32 %v969, %v1240
        %v1242 = vpop.f32.mrb[0].mxu0
        %v1243 = vadd.f32 %v969, %v1242
        %1244 = vmatprep.mubr.bf16.mxu0 0
        %1245 = vmatmul.mubr.bf16.gmra.mrb[0].mxu0 %v1038
        %v1246 = vpop.f32.mrb[0].mxu0
        %v1247 = vadd.f32 %v974, %v1246
        %v1248 = vpop.f32.mrb[0].mxu0
        %v1249 = vadd.f32 %v974, %v1248
        %v1250 = vpop.f32.mrb[0].mxu0
        %v1251 = vadd.f32 %v979, %v1250
        %v1252 = vpop.f32.mrb[0].mxu0
        %v1253 = vadd.f32 %v979, %v1252
        %1254 = vmatprep.mubr.bf16.mxu0 0
        %1255 = vmatmul.mubr.bf16.gmra.mrb[0].mxu0 %v1039
        %v1256 = vpop.f32.mrb[0].mxu0
        %v1257 = vadd.f32 %v984, %v1256
        %v1258 = vpop.f32.mrb[0].mxu0
        %v1259 = vadd.f32 %v984, %v1258
        %v1260 = vpop.f32.mrb[0].mxu0
        %v1261 = vadd.f32 %v989, %v1260
        %v1262 = vpop.f32.mrb[0].mxu0
        %v1263 = vadd.f32 %v989, %v1262
        %1264 = vmatprep.mubr.bf16.mxu0 0
        %1265 = vmatmul.mubr.bf16.gmra.mrb[0].mxu0 %v1040
        %v1266 = vpop.f32.mrb[0].mxu0
        %v1267 = vadd.f32 %v994, %v1266
        %v1268 = vpop.f32.mrb[0].mxu0
        %v1269 = vadd.f32 %v994, %v1268
        %v1270 = vpop.f32.mrb[0].mxu0
        %v1271 = vadd.f32 %v999, %v1270
        %v1272 = vpop.f32.mrb[0].mxu0
        %v1273 = vadd.f32 %v999, %v1272
        %1274 = vdwg.mxu0
        %v1275 = vmax.f32 %v1084, 0.0
        %v1276 = vmax.f32 %v1086, 0.0
        %v1277 = vmax.f32 %v1197, 0.0
        %v1278 = vmax.f32 %v1199, 0.0
        %v1279 = vmax.f32 %v1088, 0.0
        %v1280 = vmax.f32 %v1090, 0.0
        %v1281 = vmax.f32 %v1201, 0.0
        %v1282 = vmax.f32 %v1203, 0.0
        %v1283 = vmax.f32 %v1094, 0.0
        %v1284 = vmax.f32 %v1096, 0.0
        %v1285 = vmax.f32 %v1207, 0.0
        %v1286 = vmax.f32 %v1209, 0.0
        %v1287 = vmax.f32 %v1098, 0.0
        %v1288 = vmax.f32 %v1100, 0.0
        %v1289 = vmax.f32 %v1211, 0.0
        %v1290 = vmax.f32 %v1213, 0.0
        %v1291 = vmax.f32 %v1104, 0.0
        %v1292 = vmax.f32 %v1106, 0.0
        %v1293 = vmax.f32 %v1217, 0.0
        %v1294 = vmax.f32 %v1219, 0.0
        %v1295 = vmax.f32 %v1108, 0.0
        %v1296 = vmax.f32 %v1110, 0.0
        %v1297 = vmax.f32 %v1221, 0.0
        %v1298 = vmax.f32 %v1223, 0.0
        %v1299 = vmax.f32 %v1114, 0.0
        %v1300 = vmax.f32 %v1116, 0.0
        %v1301 = vmax.f32 %v1227, 0.0
        %v1302 = vmax.f32 %v1229, 0.0
        %v1303 = vmax.f32 %v1118, 0.0
        %v1304 = vmax.f32 %v1120, 0.0
        %v1305 = vmax.f32 %v1231, 0.0
        %v1306 = vmax.f32 %v1233, 0.0
        %v1307 = vmax.f32 %v1124, 0.0
        %v1308 = vmax.f32 %v1126, 0.0
        %v1309 = vmax.f32 %v1237, 0.0
        %v1310 = vmax.f32 %v1239, 0.0
        %v1311 = vmax.f32 %v1128, 0.0
        %v1312 = vmax.f32 %v1130, 0.0
        %v1313 = vmax.f32 %v1241, 0.0
        %v1314 = vmax.f32 %v1243, 0.0
        %v1315 = vmax.f32 %v1134, 0.0
        %v1316 = vmax.f32 %v1136, 0.0
        %v1317 = vmax.f32 %v1247, 0.0
        %v1318 = vmax.f32 %v1249, 0.0
        %v1319 = vmax.f32 %v1138, 0.0
        %v1320 = vmax.f32 %v1140, 0.0
        %v1321 = vmax.f32 %v1251, 0.0
        %v1322 = vmax.f32 %v1253, 0.0
        %v1323 = vmax.f32 %v1144, 0.0
        %v1324 = vmax.f32 %v1146, 0.0
        %v1325 = vmax.f32 %v1257, 0.0
        %v1326 = vmax.f32 %v1259, 0.0
        %v1327 = vmax.f32 %v1148, 0.0
        %v1328 = vmax.f32 %v1150, 0.0
        %v1329 = vmax.f32 %v1261, 0.0
        %v1330 = vmax.f32 %v1263, 0.0
        %v1331 = vmax.f32 %v1154, 0.0
        %v1332 = vmax.f32 %v1156, 0.0
        %v1333 = vmax.f32 %v1267, 0.0
        %v1334 = vmax.f32 %v1269, 0.0
        %v1335 = vmax.f32 %v1158, 0.0
        %v1336 = vmax.f32 %v1160, 0.0
        %v1337 = vmax.f32 %v1271, 0.0
        %v1338 = vmax.f32 %v1273, 0.0
        %v1339 = vpack.c.bf16 %v1279, %v1275
        %v1340 = vpack.c.bf16 %v1280, %v1276
        %v1341 = vpack.c.bf16 %v1281, %v1277
        %v1342 = vpack.c.bf16 %v1282, %v1278
        %v1343 = vpack.c.bf16 %v1287, %v1283
        %v1344 = vpack.c.bf16 %v1288, %v1284
        %v1345 = vpack.c.bf16 %v1289, %v1285
        %v1346 = vpack.c.bf16 %v1290, %v1286
        %v1347 = vpack.c.bf16 %v1295, %v1291
        %v1348 = vpack.c.bf16 %v1296, %v1292
        %v1349 = vpack.c.bf16 %v1297, %v1293
        %v1350 = vpack.c.bf16 %v1298, %v1294
        %v1351 = vpack.c.bf16 %v1303, %v1299
        %v1352 = vpack.c.bf16 %v1304, %v1300
        %v1353 = vpack.c.bf16 %v1305, %v1301
        %v1354 = vpack.c.bf16 %v1306, %v1302
        %v1355 = vpack.c.bf16 %v1311, %v1307
        %v1356 = vpack.c.bf16 %v1312, %v1308
        %v1357 = vpack.c.bf16 %v1313, %v1309
        %v1358 = vpack.c.bf16 %v1314, %v1310
        %v1359 = vpack.c.bf16 %v1319, %v1315
        %v1360 = vpack.c.bf16 %v1320, %v1316
        %v1361 = vpack.c.bf16 %v1321, %v1317
        %v1362 = vpack.c.bf16 %v1322, %v1318
        %v1363 = vpack.c.bf16 %v1327, %v1323
        %v1364 = vpack.c.bf16 %v1328, %v1324
        %v1365 = vpack.c.bf16 %v1329, %v1325
        %v1366 = vpack.c.bf16 %v1330, %v1326
        %v1367 = vpack.c.bf16 %v1335, %v1331
        %v1368 = vpack.c.bf16 %v1336, %v1332
        %v1369 = vpack.c.bf16 %v1337, %v1333
        %v1370 = vpack.c.bf16 %v1338, %v1334
        %1371 = vst [vmem:[#allocation3] sm:$0xff] %v1339
        %1372 = vst [vmem:[#allocation3 + $0x8] sm:$0xff] %v1340
        %1373 = vst [vmem:[#allocation3 + $0x10] sm:$0xff] %v1341
        %1374 = vst [vmem:[#allocation3 + $0x18] sm:$0xff] %v1342
        %1375 = vst [vmem:[#allocation3 + $0x20] sm:$0xff] %v1343
        %1376 = vst [vmem:[#allocation3 + $0x28] sm:$0xff] %v1344
        %1377 = vst [vmem:[#allocation3 + $0x30] sm:$0xff] %v1345
        %1378 = vst [vmem:[#allocation3 + $0x38] sm:$0xff] %v1346
        %1379 = vst [vmem:[#allocation3 + $0x40] sm:$0xff] %v1347
        %1380 = vst [vmem:[#allocation3 + $0x48] sm:$0xff] %v1348
        %1381 = vst [vmem:[#allocation3 + $0x50] sm:$0xff] %v1349
        %1382 = vst [vmem:[#allocation3 + $0x58] sm:$0xff] %v1350
        %1383 = vst [vmem:[#allocation3 + $0x60] sm:$0xff] %v1351
        %1384 = vst [vmem:[#allocation3 + $0x68] sm:$0xff] %v1352
        %1385 = vst [vmem:[#allocation3 + $0x70] sm:$0xff] %v1353
        %1386 = vst [vmem:[#allocation3 + $0x78] sm:$0xff] %v1354
        %1387 = vst [vmem:[#allocation3 + $0x80] sm:$0xff] %v1355
        %1388 = vst [vmem:[#allocation3 + $0x88] sm:$0xff] %v1356
        %1389 = vst [vmem:[#allocation3 + $0x90] sm:$0xff] %v1357
        %1390 = vst [vmem:[#allocation3 + $0x98] sm:$0xff] %v1358
        %1391 = vst [vmem:[#allocation3 + $0xa0] sm:$0xff] %v1359
        %1392 = vst [vmem:[#allocation3 + $0xa8] sm:$0xff] %v1360
        %1393 = vst [vmem:[#allocation3 + $0xb0] sm:$0xff] %v1361
        %1394 = vst [vmem:[#allocation3 + $0xb8] sm:$0xff] %v1362
        %1395 = vst [vmem:[#allocation3 + $0xc0] sm:$0xff] %v1363
        %1396 = vst [vmem:[#allocation3 + $0xc8] sm:$0xff] %v1364
        %1397 = vst [vmem:[#allocation3 + $0xd0] sm:$0xff] %v1365
        %1398 = vst [vmem:[#allocation3 + $0xd8] sm:$0xff] %v1366
        %1399 = vst [vmem:[#allocation3 + $0xe0] sm:$0xff] %v1367
        %1400 = vst [vmem:[#allocation3 + $0xe8] sm:$0xff] %v1368
        %1401 = vst [vmem:[#allocation3 + $0xf0] sm:$0xff] %v1369
        %1402 = vst [vmem:[#allocation3 + $0xf8] sm:$0xff] %v1370
        %v1403 = vld [vmem:[#allocation3] sm:$0xff]
        %v1404 = vld [vmem:[#allocation3 + $0x8] sm:$0xff]
        %v1405 = vld [vmem:[#allocation3 + $0x10] sm:$0xff]
        %v1406 = vld [vmem:[#allocation3 + $0x18] sm:$0xff]
        %v1407 = vld [vmem:[#allocation3 + $0x20] sm:$0xff]
        %v1408 = vld [vmem:[#allocation3 + $0x28] sm:$0xff]
        %v1409 = vld [vmem:[#allocation3 + $0x30] sm:$0xff]
        %v1410 = vld [vmem:[#allocation3 + $0x38] sm:$0xff]
        %v1411 = vld [vmem:[#allocation3 + $0x40] sm:$0xff]
        %v1412 = vld [vmem:[#allocation3 + $0x48] sm:$0xff]
        %v1413 = vld [vmem:[#allocation3 + $0x50] sm:$0xff]
        %v1414 = vld [vmem:[#allocation3 + $0x58] sm:$0xff]
        %v1415 = vld [vmem:[#allocation3 + $0x60] sm:$0xff]
        %v1416 = vld [vmem:[#allocation3 + $0x68] sm:$0xff]
        %v1417 = vld [vmem:[#allocation3 + $0x70] sm:$0xff]
        %v1418 = vld [vmem:[#allocation3 + $0x78] sm:$0xff]
        %v1419 = vld [vmem:[#allocation3 + $0x80] sm:$0xff]
        %v1420 = vld [vmem:[#allocation3 + $0x88] sm:$0xff]
        %v1421 = vld [vmem:[#allocation3 + $0x90] sm:$0xff]
        %v1422 = vld [vmem:[#allocation3 + $0x98] sm:$0xff]
        %v1423 = vld [vmem:[#allocation3 + $0xa0] sm:$0xff]
        %v1424 = vld [vmem:[#allocation3 + $0xa8] sm:$0xff]
        %v1425 = vld [vmem:[#allocation3 + $0xb0] sm:$0xff]
        %v1426 = vld [vmem:[#allocation3 + $0xb8] sm:$0xff]
        %v1427 = vld [vmem:[#allocation3 + $0xc0] sm:$0xff]
        %v1428 = vld [vmem:[#allocation3 + $0xc8] sm:$0xff]
        %v1429 = vld [vmem:[#allocation3 + $0xd0] sm:$0xff]
        %v1430 = vld [vmem:[#allocation3 + $0xd8] sm:$0xff]
        %v1431 = vld [vmem:[#allocation3 + $0xe0] sm:$0xff]
        %v1432 = vld [vmem:[#allocation3 + $0xe8] sm:$0xff]
        %v1433 = vld [vmem:[#allocation3 + $0xf0] sm:$0xff]
        %v1434 = vld [vmem:[#allocation3 + $0xf8] sm:$0xff]
        %v1435 = vld [vmem:[%s5] sm:$0xf]
        %v1436 = vld [vmem:[%s5 + $0x4] sm:$0xf]
        %v1437 = vld [vmem:[%s5 + $0x8] sm:$0xf]
        %v1438 = vld [vmem:[%s5 + $0xc] sm:$0xf]
        %v1439 = vld [vmem:[%s5 + $0x10] sm:$0xf]
        %v1440 = vld [vmem:[%s5 + $0x14] sm:$0xf]
        %v1441 = vld [vmem:[%s5 + $0x18] sm:$0xf]
        %v1442 = vld [vmem:[%s5 + $0x1c] sm:$0xf]
        %v1443 = vld [vmem:[%s5 + $0x20] sm:$0xf]
        %v1444 = vld [vmem:[%s5 + $0x24] sm:$0xf]
        %v1445 = vld [vmem:[%s5 + $0x28] sm:$0xf]
        %v1446 = vld [vmem:[%s5 + $0x2c] sm:$0xf]
        %v1447 = vld [vmem:[%s5 + $0x30] sm:$0xf]
        %v1448 = vld [vmem:[%s5 + $0x34] sm:$0xf]
        %v1449 = vld [vmem:[%s5 + $0x38] sm:$0xf]
        %v1450 = vld [vmem:[%s5 + $0x3c] sm:$0xf]
        %v1451 = vld [vmem:[%s5 + $0x40] sm:$0xf]
        %v1452 = vld [vmem:[%s5 + $0x44] sm:$0xf]
        %v1453 = vld [vmem:[%s5 + $0x48] sm:$0xf]
        %v1454 = vld [vmem:[%s5 + $0x4c] sm:$0xf]
        %v1455 = vld [vmem:[%s5 + $0x50] sm:$0xf]
        %v1456 = vld [vmem:[%s5 + $0x54] sm:$0xf]
        %v1457 = vld [vmem:[%s5 + $0x58] sm:$0xf]
        %v1458 = vld [vmem:[%s5 + $0x5c] sm:$0xf]
        %v1459 = vld [vmem:[%s5 + $0x60] sm:$0xf]
        %v1460 = vld [vmem:[%s5 + $0x64] sm:$0xf]
        %v1461 = vld [vmem:[%s5 + $0x68] sm:$0xf]
        %v1462 = vld [vmem:[%s5 + $0x6c] sm:$0xf]
        %v1463 = vld [vmem:[%s5 + $0x70] sm:$0xf]
        %v1464 = vld [vmem:[%s5 + $0x74] sm:$0xf]
        %v1465 = vld [vmem:[%s5 + $0x78] sm:$0xf]
        %v1466 = vld [vmem:[%s5 + $0x7c] sm:$0xf]
        %v1467 = vld [vmem:[%s6] sm:$0xff]
        %v1468 = vld [vmem:[%s6 + $0x8] sm:$0xff]
        %v1469 = vld [vmem:[%s6 + $0x10] sm:$0xff]
        %v1470 = vld [vmem:[%s6 + $0x18] sm:$0xff]
        %v1471 = vld [vmem:[%s6 + $0x20] sm:$0xff]
        %v1472 = vld [vmem:[%s6 + $0x28] sm:$0xff]
        %v1473 = vld [vmem:[%s6 + $0x30] sm:$0xff]
        %v1474 = vld [vmem:[%s6 + $0x38] sm:$0xff]
        %v1475 = vld [vmem:[%s6 + $0x40] sm:$0xff]
        %v1476 = vld [vmem:[%s6 + $0x48] sm:$0xff]
        %v1477 = vld [vmem:[%s6 + $0x50] sm:$0xff]
        %v1478 = vld [vmem:[%s6 + $0x58] sm:$0xff]
        %v1479 = vld [vmem:[%s6 + $0x60] sm:$0xff]
        %v1480 = vld [vmem:[%s6 + $0x68] sm:$0xff]
        %v1481 = vld [vmem:[%s6 + $0x70] sm:$0xff]
        %v1482 = vld [vmem:[%s6 + $0x78] sm:$0xff]
        %v1483 = vld [vmem:[%s6 + $0x80] sm:$0xff]
        %v1484 = vld [vmem:[%s6 + $0x88] sm:$0xff]
        %v1485 = vld [vmem:[%s6 + $0x90] sm:$0xff]
        %v1486 = vld [vmem:[%s6 + $0x98] sm:$0xff]
        %v1487 = vld [vmem:[%s6 + $0xa0] sm:$0xff]
        %v1488 = vld [vmem:[%s6 + $0xa8] sm:$0xff]
        %v1489 = vld [vmem:[%s6 + $0xb0] sm:$0xff]
        %v1490 = vld [vmem:[%s6 + $0xb8] sm:$0xff]
        %v1491 = vld [vmem:[%s6 + $0xc0] sm:$0xff]
        %v1492 = vld [vmem:[%s6 + $0xc8] sm:$0xff]
        %v1493 = vld [vmem:[%s6 + $0xd0] sm:$0xff]
        %v1494 = vld [vmem:[%s6 + $0xd8] sm:$0xff]
        %v1495 = vld [vmem:[%s6 + $0xe0] sm:$0xff]
        %v1496 = vld [vmem:[%s6 + $0xe8] sm:$0xff]
        %v1497 = vld [vmem:[%s6 + $0xf0] sm:$0xff]
        %v1498 = vld [vmem:[%s6 + $0xf8] sm:$0xff]
        %1500 = vset.pattern.permute.xlu0 0
        %1501 = vperm.xlu0 %1500, %v1467
        %v1502 = vpop.permute.xlu0 %1501
        %1505 = vset.pattern.permute.xlu0 0
        %1506 = vperm.xlu0 %1505, %v1468
        %v1507 = vpop.permute.xlu0 %1506
        %1510 = vset.pattern.permute.xlu0 0
        %1511 = vperm.xlu0 %1510, %v1469
        %v1512 = vpop.permute.xlu0 %1511
        %1515 = vset.pattern.permute.xlu0 0
        %1516 = vperm.xlu0 %1515, %v1470
        %v1517 = vpop.permute.xlu0 %1516
        %1520 = vset.pattern.permute.xlu0 0
        %1521 = vperm.xlu0 %1520, %v1471
        %v1522 = vpop.permute.xlu0 %1521
        %1525 = vset.pattern.permute.xlu0 0
        %1526 = vperm.xlu0 %1525, %v1472
        %v1527 = vpop.permute.xlu0 %1526
        %1530 = vset.pattern.permute.xlu0 0
        %1531 = vperm.xlu0 %1530, %v1473
        %v1532 = vpop.permute.xlu0 %1531
        %1535 = vset.pattern.permute.xlu0 0
        %1536 = vperm.xlu0 %1535, %v1474
        %v1537 = vpop.permute.xlu0 %1536
        %1540 = vset.pattern.permute.xlu0 0
        %1541 = vperm.xlu0 %1540, %v1475
        %v1542 = vpop.permute.xlu0 %1541
        %1545 = vset.pattern.permute.xlu0 0
        %1546 = vperm.xlu0 %1545, %v1476
        %v1547 = vpop.permute.xlu0 %1546
        %1550 = vset.pattern.permute.xlu0 0
        %1551 = vperm.xlu0 %1550, %v1477
        %v1552 = vpop.permute.xlu0 %1551
        %1555 = vset.pattern.permute.xlu0 0
        %1556 = vperm.xlu0 %1555, %v1478
        %v1557 = vpop.permute.xlu0 %1556
        %1560 = vset.pattern.permute.xlu0 0
        %1561 = vperm.xlu0 %1560, %v1479
        %v1562 = vpop.permute.xlu0 %1561
        %1565 = vset.pattern.permute.xlu0 0
        %1566 = vperm.xlu0 %1565, %v1480
        %v1567 = vpop.permute.xlu0 %1566
        %1570 = vset.pattern.permute.xlu0 0
        %1571 = vperm.xlu0 %1570, %v1481
        %v1572 = vpop.permute.xlu0 %1571
        %1575 = vset.pattern.permute.xlu0 0
        %1576 = vperm.xlu0 %1575, %v1482
        %v1577 = vpop.permute.xlu0 %1576
        %1580 = vset.pattern.permute.xlu0 0
        %1581 = vperm.xlu0 %1580, %v1483
        %v1582 = vpop.permute.xlu0 %1581
        %1585 = vset.pattern.permute.xlu0 0
        %1586 = vperm.xlu0 %1585, %v1484
        %v1587 = vpop.permute.xlu0 %1586
        %1590 = vset.pattern.permute.xlu0 0
        %1591 = vperm.xlu0 %1590, %v1485
        %v1592 = vpop.permute.xlu0 %1591
        %1595 = vset.pattern.permute.xlu0 0
        %1596 = vperm.xlu0 %1595, %v1486
        %v1597 = vpop.permute.xlu0 %1596
        %1600 = vset.pattern.permute.xlu0 0
        %1601 = vperm.xlu0 %1600, %v1487
        %v1602 = vpop.permute.xlu0 %1601
        %1605 = vset.pattern.permute.xlu0 0
        %1606 = vperm.xlu0 %1605, %v1488
        %v1607 = vpop.permute.xlu0 %1606
        %1610 = vset.pattern.permute.xlu0 0
        %1611 = vperm.xlu0 %1610, %v1489
        %v1612 = vpop.permute.xlu0 %1611
        %1615 = vset.pattern.permute.xlu0 0
        %1616 = vperm.xlu0 %1615, %v1490
        %v1617 = vpop.permute.xlu0 %1616
        %1620 = vset.pattern.permute.xlu0 0
        %1621 = vperm.xlu0 %1620, %v1491
        %v1622 = vpop.permute.xlu0 %1621
        %1625 = vset.pattern.permute.xlu0 0
        %1626 = vperm.xlu0 %1625, %v1492
        %v1627 = vpop.permute.xlu0 %1626
        %1630 = vset.pattern.permute.xlu0 0
        %1631 = vperm.xlu0 %1630, %v1493
        %v1632 = vpop.permute.xlu0 %1631
        %1635 = vset.pattern.permute.xlu0 0
        %1636 = vperm.xlu0 %1635, %v1494
        %v1637 = vpop.permute.xlu0 %1636
        %1640 = vset.pattern.permute.xlu0 0
        %1641 = vperm.xlu0 %1640, %v1495
        %v1642 = vpop.permute.xlu0 %1641
        %1645 = vset.pattern.permute.xlu0 0
        %1646 = vperm.xlu0 %1645, %v1496
        %v1647 = vpop.permute.xlu0 %1646
        %1650 = vset.pattern.permute.xlu0 0
        %1651 = vperm.xlu0 %1650, %v1497
        %v1652 = vpop.permute.xlu0 %1651
        %1655 = vset.pattern.permute.xlu0 0
        %1656 = vperm.xlu0 %1655, %v1498
        %v1657 = vpop.permute.xlu0 %1656
        %v1691 = vunpack.c.l.b16 %v1435
        %v1692 = vunpack.c.l.b16 %v1436
        %v1693 = vunpack.c.l.b16 %v1437
        %v1694 = vunpack.c.l.b16 %v1438
        %v1695 = vunpack.c.l.b16 %v1439
        %v1696 = vunpack.c.l.b16 %v1440
        %v1697 = vunpack.c.l.b16 %v1441
        %v1698 = vunpack.c.l.b16 %v1442
        %v1699 = vunpack.c.l.b16 %v1443
        %v1700 = vunpack.c.l.b16 %v1444
        %v1701 = vunpack.c.l.b16 %v1445
        %v1702 = vunpack.c.l.b16 %v1446
        %v1703 = vunpack.c.l.b16 %v1447
        %v1704 = vunpack.c.l.b16 %v1448
        %v1705 = vunpack.c.l.b16 %v1449
        %v1706 = vunpack.c.l.b16 %v1450
        %v1707 = vunpack.c.l.b16 %v1451
        %v1708 = vunpack.c.l.b16 %v1452
        %v1709 = vunpack.c.l.b16 %v1453
        %v1710 = vunpack.c.l.b16 %v1454
        %v1711 = vunpack.c.l.b16 %v1455
        %v1712 = vunpack.c.l.b16 %v1456
        %v1713 = vunpack.c.l.b16 %v1457
        %v1714 = vunpack.c.l.b16 %v1458
        %v1715 = vunpack.c.l.b16 %v1459
        %v1716 = vunpack.c.l.b16 %v1460
        %v1717 = vunpack.c.l.b16 %v1461
        %v1718 = vunpack.c.l.b16 %v1462
        %v1719 = vunpack.c.l.b16 %v1463
        %v1720 = vunpack.c.l.b16 %v1464
        %v1721 = vunpack.c.l.b16 %v1465
        %v1722 = vunpack.c.l.b16 %v1466
        %v1723 = vpack.c.b16 %v1692, %v1691
        %v1724 = vpack.c.b16 %v1694, %v1693
        %v1725 = vpack.c.b16 %v1696, %v1695
        %v1726 = vpack.c.b16 %v1698, %v1697
        %v1727 = vpack.c.b16 %v1700, %v1699
        %v1728 = vpack.c.b16 %v1702, %v1701
        %v1729 = vpack.c.b16 %v1704, %v1703
        %v1730 = vpack.c.b16 %v1706, %v1705
        %v1731 = vpack.c.b16 %v1708, %v1707
        %v1732 = vpack.c.b16 %v1710, %v1709
        %v1733 = vpack.c.b16 %v1712, %v1711
        %v1734 = vpack.c.b16 %v1714, %v1713
        %v1735 = vpack.c.b16 %v1716, %v1715
        %v1736 = vpack.c.b16 %v1718, %v1717
        %v1737 = vpack.c.b16 %v1720, %v1719
        %v1738 = vpack.c.b16 %v1722, %v1721
        %1755 = vmatprep.subr.bf16.mxu0 %v1404
        %1756 = vmatpush1.bf16.msra.mxu0 %v1403
        %1757 = vmatprep.subr.bf16.mxu0 %v1408
        %1758 = vmatpush1.bf16.msra.mxu0 %v1407
        %1759 = vmatprep.subr.bf16.mxu0 %v1412
        %1760 = vmatpush1.bf16.msra.mxu0 %v1411
        %1761 = vmatprep.subr.bf16.mxu0 %v1416
        %1762 = vmatpush1.bf16.msra.mxu0 %v1415
        %1763 = vmatprep.subr.bf16.mxu0 %v1420
        %1764 = vmatpush1.bf16.msra.mxu0 %v1419
        %1765 = vmatprep.subr.bf16.mxu0 %v1424
        %1766 = vmatpush1.bf16.msra.mxu0 %v1423
        %1767 = vmatprep.subr.bf16.mxu0 %v1428
        %1768 = vmatpush1.bf16.msra.mxu0 %v1427
        %1769 = vmatprep.subr.bf16.mxu0 %v1432
        %1770 = vmatpush1.bf16.msra.mxu0 %v1431
        %1771 = vmatprep.subr.bf16.mxu0 0
        %1772 = vmatpush1.bf16.msra.mxu0 0
        %1773 = vmatprep.subr.bf16.mxu0 0
        %1774 = vmatpush1.bf16.msra.mxu0 0
        %1775 = vmatprep.subr.bf16.mxu0 0
        %1776 = vmatpush1.bf16.msra.mxu0 0
        %1777 = vmatprep.subr.bf16.mxu0 0
        %1778 = vmatpush1.bf16.msra.mxu0 0
        %1779 = vmatprep.subr.bf16.mxu0 0
        %1780 = vmatpush1.bf16.msra.mxu0 0
        %1781 = vmatprep.subr.bf16.mxu0 0
        %1782 = vmatpush1.bf16.msra.mxu0 0
        %1783 = vmatprep.subr.bf16.mxu0 0
        %1784 = vmatpush1.bf16.msra.mxu0 0
        %1785 = vmatprep.subr.bf16.mxu0 0
        %1786 = vmatpush1.bf16.msra.mxu0 0
        %1787 = vmatprep.mubr.bf16.mxu0 0
        %1788 = vmatmul.mubr.bf16.gmra.mrb[0].mxu0 %v1723
        %v1789 = vpop.f32.mrb[0].mxu0
        %v1790 = vadd.f32 %v1502, %v1789
        %v1791 = vpop.f32.mrb[0].mxu0
        %v1792 = vadd.f32 %v1502, %v1791
        %v1793 = vpop.f32.mrb[0].mxu0
        %v1794 = vadd.f32 %v1507, %v1793
        %v1795 = vpop.f32.mrb[0].mxu0
        %v1796 = vadd.f32 %v1507, %v1795
        %1797 = vmatprep.mubr.bf16.mxu0 0
        %1798 = vmatmul.mubr.bf16.gmra.mrb[0].mxu0 %v1724
        %v1799 = vpop.f32.mrb[0].mxu0
        %v1800 = vadd.f32 %v1512, %v1799
        %v1801 = vpop.f32.mrb[0].mxu0
        %v1802 = vadd.f32 %v1512, %v1801
        %v1803 = vpop.f32.mrb[0].mxu0
        %v1804 = vadd.f32 %v1517, %v1803
        %v1805 = vpop.f32.mrb[0].mxu0
        %v1806 = vadd.f32 %v1517, %v1805
        %1807 = vmatprep.mubr.bf16.mxu0 0
        %1808 = vmatmul.mubr.bf16.gmra.mrb[0].mxu0 %v1725
        %v1809 = vpop.f32.mrb[0].mxu0
        %v1810 = vadd.f32 %v1522, %v1809
        %v1811 = vpop.f32.mrb[0].mxu0
        %v1812 = vadd.f32 %v1522, %v1811
        %v1813 = vpop.f32.mrb[0].mxu0
        %v1814 = vadd.f32 %v1527, %v1813
        %v1815 = vpop.f32.mrb[0].mxu0
        %v1816 = vadd.f32 %v1527, %v1815
        %1817 = vmatprep.mubr.bf16.mxu0 0
        %1818 = vmatmul.mubr.bf16.gmra.mrb[0].mxu0 %v1726
        %v1819 = vpop.f32.mrb[0].mxu0
        %v1820 = vadd.f32 %v1532, %v1819
        %v1821 = vpop.f32.mrb[0].mxu0
        %v1822 = vadd.f32 %v1532, %v1821
        %v1823 = vpop.f32.mrb[0].mxu0
        %v1824 = vadd.f32 %v1537, %v1823
        %v1825 = vpop.f32.mrb[0].mxu0
        %v1826 = vadd.f32 %v1537, %v1825
        %1827 = vmatprep.mubr.bf16.mxu0 0
        %1828 = vmatmul.mubr.bf16.gmra.mrb[0].mxu0 %v1727
        %v1829 = vpop.f32.mrb[0].mxu0
        %v1830 = vadd.f32 %v1542, %v1829
        %v1831 = vpop.f32.mrb[0].mxu0
        %v1832 = vadd.f32 %v1542, %v1831
        %v1833 = vpop.f32.mrb[0].mxu0
        %v1834 = vadd.f32 %v1547, %v1833
        %v1835 = vpop.f32.mrb[0].mxu0
        %v1836 = vadd.f32 %v1547, %v1835
        %1837 = vmatprep.mubr.bf16.mxu0 0
        %1838 = vmatmul.mubr.bf16.gmra.mrb[0].mxu0 %v1728
        %v1839 = vpop.f32.mrb[0].mxu0
        %v1840 = vadd.f32 %v1552, %v1839
        %v1841 = vpop.f32.mrb[0].mxu0
        %v1842 = vadd.f32 %v1552, %v1841
        %v1843 = vpop.f32.mrb[0].mxu0
        %v1844 = vadd.f32 %v1557, %v1843
        %v1845 = vpop.f32.mrb[0].mxu0
        %v1846 = vadd.f32 %v1557, %v1845
        %1847 = vmatprep.mubr.bf16.mxu0 0
        %1848 = vmatmul.mubr.bf16.gmra.mrb[0].mxu0 %v1729
        %v1849 = vpop.f32.mrb[0].mxu0
        %v1850 = vadd.f32 %v1562, %v1849
        %v1851 = vpop.f32.mrb[0].mxu0
        %v1852 = vadd.f32 %v1562, %v1851
        %v1853 = vpop.f32.mrb[0].mxu0
        %v1854 = vadd.f32 %v1567, %v1853
        %v1855 = vpop.f32.mrb[0].mxu0
        %v1856 = vadd.f32 %v1567, %v1855
        %1857 = vmatprep.mubr.bf16.mxu0 0
        %1858 = vmatmul.mubr.bf16.gmra.mrb[0].mxu0 %v1730
        %v1859 = vpop.f32.mrb[0].mxu0
        %v1860 = vadd.f32 %v1572, %v1859
        %v1861 = vpop.f32.mrb[0].mxu0
        %v1862 = vadd.f32 %v1572, %v1861
        %v1863 = vpop.f32.mrb[0].mxu0
        %v1864 = vadd.f32 %v1577, %v1863
        %v1865 = vpop.f32.mrb[0].mxu0
        %v1866 = vadd.f32 %v1577, %v1865
        %1867 = vmatprep.mubr.bf16.mxu0 0
        %1868 = vmatmul.mubr.bf16.gmra.mrb[0].mxu0 %v1731
        %v1869 = vpop.f32.mrb[0].mxu0
        %v1870 = vadd.f32 %v1582, %v1869
        %v1871 = vpop.f32.mrb[0].mxu0
        %v1872 = vadd.f32 %v1582, %v1871
        %v1873 = vpop.f32.mrb[0].mxu0
        %v1874 = vadd.f32 %v1587, %v1873
        %v1875 = vpop.f32.mrb[0].mxu0
        %v1876 = vadd.f32 %v1587, %v1875
        %1877 = vmatprep.mubr.bf16.mxu0 0
        %1878 = vmatmul.mubr.bf16.gmra.mrb[0].mxu0 %v1732
        %v1879 = vpop.f32.mrb[0].mxu0
        %v1880 = vadd.f32 %v1592, %v1879
        %v1881 = vpop.f32.mrb[0].mxu0
        %v1882 = vadd.f32 %v1592, %v1881
        %v1883 = vpop.f32.mrb[0].mxu0
        %v1884 = vadd.f32 %v1597, %v1883
        %v1885 = vpop.f32.mrb[0].mxu0
        %v1886 = vadd.f32 %v1597, %v1885
        %1887 = vmatprep.mubr.bf16.mxu0 0
        %1888 = vmatmul.mubr.bf16.gmra.mrb[0].mxu0 %v1733
        %v1889 = vpop.f32.mrb[0].mxu0
        %v1890 = vadd.f32 %v1602, %v1889
        %v1891 = vpop.f32.mrb[0].mxu0
        %v1892 = vadd.f32 %v1602, %v1891
        %v1893 = vpop.f32.mrb[0].mxu0
        %v1894 = vadd.f32 %v1607, %v1893
        %v1895 = vpop.f32.mrb[0].mxu0
        %v1896 = vadd.f32 %v1607, %v1895
        %1897 = vmatprep.mubr.bf16.mxu0 0
        %1898 = vmatmul.mubr.bf16.gmra.mrb[0].mxu0 %v1734
        %v1899 = vpop.f32.mrb[0].mxu0
        %v1900 = vadd.f32 %v1612, %v1899
        %v1901 = vpop.f32.mrb[0].mxu0
        %v1902 = vadd.f32 %v1612, %v1901
        %v1903 = vpop.f32.mrb[0].mxu0
        %v1904 = vadd.f32 %v1617, %v1903
        %v1905 = vpop.f32.mrb[0].mxu0
        %v1906 = vadd.f32 %v1617, %v1905
        %1907 = vmatprep.mubr.bf16.mxu0 0
        %1908 = vmatmul.mubr.bf16.gmra.mrb[0].mxu0 %v1735
        %v1909 = vpop.f32.mrb[0].mxu0
        %v1910 = vadd.f32 %v1622, %v1909
        %v1911 = vpop.f32.mrb[0].mxu0
        %v1912 = vadd.f32 %v1622, %v1911
        %v1913 = vpop.f32.mrb[0].mxu0
        %v1914 = vadd.f32 %v1627, %v1913
        %v1915 = vpop.f32.mrb[0].mxu0
        %v1916 = vadd.f32 %v1627, %v1915
        %1917 = vmatprep.mubr.bf16.mxu0 0
        %1918 = vmatmul.mubr.bf16.gmra.mrb[0].mxu0 %v1736
        %v1919 = vpop.f32.mrb[0].mxu0
        %v1920 = vadd.f32 %v1632, %v1919
        %v1921 = vpop.f32.mrb[0].mxu0
        %v1922 = vadd.f32 %v1632, %v1921
        %v1923 = vpop.f32.mrb[0].mxu0
        %v1924 = vadd.f32 %v1637, %v1923
        %v1925 = vpop.f32.mrb[0].mxu0
        %v1926 = vadd.f32 %v1637, %v1925
        %1927 = vmatprep.mubr.bf16.mxu0 0
        %1928 = vmatmul.mubr.bf16.gmra.mrb[0].mxu0 %v1737
        %v1929 = vpop.f32.mrb[0].mxu0
        %v1930 = vadd.f32 %v1642, %v1929
        %v1931 = vpop.f32.mrb[0].mxu0
        %v1932 = vadd.f32 %v1642, %v1931
        %v1933 = vpop.f32.mrb[0].mxu0
        %v1934 = vadd.f32 %v1647, %v1933
        %v1935 = vpop.f32.mrb[0].mxu0
        %v1936 = vadd.f32 %v1647, %v1935
        %1937 = vmatprep.mubr.bf16.mxu0 0
        %1938 = vmatmul.mubr.bf16.gmra.mrb[0].mxu0 %v1738
        %v1939 = vpop.f32.mrb[0].mxu0
        %v1940 = vadd.f32 %v1652, %v1939
        %v1941 = vpop.f32.mrb[0].mxu0
        %v1942 = vadd.f32 %v1652, %v1941
        %v1943 = vpop.f32.mrb[0].mxu0
        %v1944 = vadd.f32 %v1657, %v1943
        %v1945 = vpop.f32.mrb[0].mxu0
        %v1946 = vadd.f32 %v1657, %v1945
        %1947 = vdwg.mxu0
        %1948 = vmatprep.subr.bf16.mxu0 %v1406
        %1949 = vmatpush1.bf16.msra.mxu0 %v1405
        %1950 = vmatprep.subr.bf16.mxu0 %v1410
        %1951 = vmatpush1.bf16.msra.mxu0 %v1409
        %1952 = vmatprep.subr.bf16.mxu0 %v1414
        %1953 = vmatpush1.bf16.msra.mxu0 %v1413
        %1954 = vmatprep.subr.bf16.mxu0 %v1418
        %1955 = vmatpush1.bf16.msra.mxu0 %v1417
        %1956 = vmatprep.subr.bf16.mxu0 %v1422
        %1957 = vmatpush1.bf16.msra.mxu0 %v1421
        %1958 = vmatprep.subr.bf16.mxu0 %v1426
        %1959 = vmatpush1.bf16.msra.mxu0 %v1425
        %1960 = vmatprep.subr.bf16.mxu0 %v1430
        %1961 = vmatpush1.bf16.msra.mxu0 %v1429
        %1962 = vmatprep.subr.bf16.mxu0 %v1434
        %1963 = vmatpush1.bf16.msra.mxu0 %v1433
        %1964 = vmatprep.subr.bf16.mxu0 0
        %1965 = vmatpush1.bf16.msra.mxu0 0
        %1966 = vmatprep.subr.bf16.mxu0 0
        %1967 = vmatpush1.bf16.msra.mxu0 0
        %1968 = vmatprep.subr.bf16.mxu0 0
        %1969 = vmatpush1.bf16.msra.mxu0 0
        %1970 = vmatprep.subr.bf16.mxu0 0
        %1971 = vmatpush1.bf16.msra.mxu0 0
        %1972 = vmatprep.subr.bf16.mxu0 0
        %1973 = vmatpush1.bf16.msra.mxu0 0
        %1974 = vmatprep.subr.bf16.mxu0 0
        %1975 = vmatpush1.bf16.msra.mxu0 0
        %1976 = vmatprep.subr.bf16.mxu0 0
        %1977 = vmatpush1.bf16.msra.mxu0 0
        %1978 = vmatprep.subr.bf16.mxu0 0
        %1979 = vmatpush1.bf16.msra.mxu0 0
        %1980 = vmatprep.mubr.bf16.mxu0 0
        %1981 = vmatmul.mubr.bf16.gmra.mrb[0].mxu0 %v1723
        %v1982 = vpop.f32.mrb[0].mxu0
        %v1983 = vadd.f32 %v1502, %v1982
        %v1984 = vpop.f32.mrb[0].mxu0
        %v1985 = vadd.f32 %v1502, %v1984
        %v1986 = vpop.f32.mrb[0].mxu0
        %v1987 = vadd.f32 %v1507, %v1986
        %v1988 = vpop.f32.mrb[0].mxu0
        %v1989 = vadd.f32 %v1507, %v1988
        %1990 = vmatprep.mubr.bf16.mxu0 0
        %1991 = vmatmul.mubr.bf16.gmra.mrb[0].mxu0 %v1724
        %v1992 = vpop.f32.mrb[0].mxu0
        %v1993 = vadd.f32 %v1512, %v1992
        %v1994 = vpop.f32.mrb[0].mxu0
        %v1995 = vadd.f32 %v1512, %v1994
        %v1996 = vpop.f32.mrb[0].mxu0
        %v1997 = vadd.f32 %v1517, %v1996
        %v1998 = vpop.f32.mrb[0].mxu0
        %v1999 = vadd.f32 %v1517, %v1998
        %2000 = vmatprep.mubr.bf16.mxu0 0
        %2001 = vmatmul.mubr.bf16.gmra.mrb[0].mxu0 %v1725
        %v2002 = vpop.f32.mrb[0].mxu0
        %v2003 = vadd.f32 %v1522, %v2002
        %v2004 = vpop.f32.mrb[0].mxu0
        %v2005 = vadd.f32 %v1522, %v2004
        %v2006 = vpop.f32.mrb[0].mxu0
        %v2007 = vadd.f32 %v1527, %v2006
        %v2008 = vpop.f32.mrb[0].mxu0
        %v2009 = vadd.f32 %v1527, %v2008
        %2010 = vmatprep.mubr.bf16.mxu0 0
        %2011 = vmatmul.mubr.bf16.gmra.mrb[0].mxu0 %v1726
        %v2012 = vpop.f32.mrb[0].mxu0
        %v2013 = vadd.f32 %v1532, %v2012
        %v2014 = vpop.f32.mrb[0].mxu0
        %v2015 = vadd.f32 %v1532, %v2014
        %v2016 = vpop.f32.mrb[0].mxu0
        %v2017 = vadd.f32 %v1537, %v2016
        %v2018 = vpop.f32.mrb[0].mxu0
        %v2019 = vadd.f32 %v1537, %v2018
        %2020 = vmatprep.mubr.bf16.mxu0 0
        %2021 = vmatmul.mubr.bf16.gmra.mrb[0].mxu0 %v1727
        %v2022 = vpop.f32.mrb[0].mxu0
        %v2023 = vadd.f32 %v1542, %v2022
        %v2024 = vpop.f32.mrb[0].mxu0
        %v2025 = vadd.f32 %v1542, %v2024
        %v2026 = vpop.f32.mrb[0].mxu0
        %v2027 = vadd.f32 %v1547, %v2026
        %v2028 = vpop.f32.mrb[0].mxu0
        %v2029 = vadd.f32 %v1547, %v2028
        %2030 = vmatprep.mubr.bf16.mxu0 0
        %2031 = vmatmul.mubr.bf16.gmra.mrb[0].mxu0 %v1728
        %v2032 = vpop.f32.mrb[0].mxu0
        %v2033 = vadd.f32 %v1552, %v2032
        %v2034 = vpop.f32.mrb[0].mxu0
        %v2035 = vadd.f32 %v1552, %v2034
        %v2036 = vpop.f32.mrb[0].mxu0
        %v2037 = vadd.f32 %v1557, %v2036
        %v2038 = vpop.f32.mrb[0].mxu0
        %v2039 = vadd.f32 %v1557, %v2038
        %2040 = vmatprep.mubr.bf16.mxu0 0
        %2041 = vmatmul.mubr.bf16.gmra.mrb[0].mxu0 %v1729
        %v2042 = vpop.f32.mrb[0].mxu0
        %v2043 = vadd.f32 %v1562, %v2042
        %v2044 = vpop.f32.mrb[0].mxu0
        %v2045 = vadd.f32 %v1562, %v2044
        %v2046 = vpop.f32.mrb[0].mxu0
        %v2047 = vadd.f32 %v1567, %v2046
        %v2048 = vpop.f32.mrb[0].mxu0
        %v2049 = vadd.f32 %v1567, %v2048
        %2050 = vmatprep.mubr.bf16.mxu0 0
        %2051 = vmatmul.mubr.bf16.gmra.mrb[0].mxu0 %v1730
        %v2052 = vpop.f32.mrb[0].mxu0
        %v2053 = vadd.f32 %v1572, %v2052
        %v2054 = vpop.f32.mrb[0].mxu0
        %v2055 = vadd.f32 %v1572, %v2054
        %v2056 = vpop.f32.mrb[0].mxu0
        %v2057 = vadd.f32 %v1577, %v2056
        %v2058 = vpop.f32.mrb[0].mxu0
        %v2059 = vadd.f32 %v1577, %v2058
        %2060 = vmatprep.mubr.bf16.mxu0 0
        %2061 = vmatmul.mubr.bf16.gmra.mrb[0].mxu0 %v1731
        %v2062 = vpop.f32.mrb[0].mxu0
        %v2063 = vadd.f32 %v1582, %v2062
        %v2064 = vpop.f32.mrb[0].mxu0
        %v2065 = vadd.f32 %v1582, %v2064
        %v2066 = vpop.f32.mrb[0].mxu0
        %v2067 = vadd.f32 %v1587, %v2066
        %v2068 = vpop.f32.mrb[0].mxu0
        %v2069 = vadd.f32 %v1587, %v2068
        %2070 = vmatprep.mubr.bf16.mxu0 0
        %2071 = vmatmul.mubr.bf16.gmra.mrb[0].mxu0 %v1732
        %v2072 = vpop.f32.mrb[0].mxu0
        %v2073 = vadd.f32 %v1592, %v2072
        %v2074 = vpop.f32.mrb[0].mxu0
        %v2075 = vadd.f32 %v1592, %v2074
        %v2076 = vpop.f32.mrb[0].mxu0
        %v2077 = vadd.f32 %v1597, %v2076
        %v2078 = vpop.f32.mrb[0].mxu0
        %v2079 = vadd.f32 %v1597, %v2078
        %2080 = vmatprep.mubr.bf16.mxu0 0
        %2081 = vmatmul.mubr.bf16.gmra.mrb[0].mxu0 %v1733
        %v2082 = vpop.f32.mrb[0].mxu0
        %v2083 = vadd.f32 %v1602, %v2082
        %v2084 = vpop.f32.mrb[0].mxu0
        %v2085 = vadd.f32 %v1602, %v2084
        %v2086 = vpop.f32.mrb[0].mxu0
        %v2087 = vadd.f32 %v1607, %v2086
        %v2088 = vpop.f32.mrb[0].mxu0
        %v2089 = vadd.f32 %v1607, %v2088
        %2090 = vmatprep.mubr.bf16.mxu0 0
        %2091 = vmatmul.mubr.bf16.gmra.mrb[0].mxu0 %v1734
        %v2092 = vpop.f32.mrb[0].mxu0
        %v2093 = vadd.f32 %v1612, %v2092
        %v2094 = vpop.f32.mrb[0].mxu0
        %v2095 = vadd.f32 %v1612, %v2094
        %v2096 = vpop.f32.mrb[0].mxu0
        %v2097 = vadd.f32 %v1617, %v2096
        %v2098 = vpop.f32.mrb[0].mxu0
        %v2099 = vadd.f32 %v1617, %v2098
        %2100 = vmatprep.mubr.bf16.mxu0 0
        %2101 = vmatmul.mubr.bf16.gmra.mrb[0].mxu0 %v1735
        %v2102 = vpop.f32.mrb[0].mxu0
        %v2103 = vadd.f32 %v1622, %v2102
        %v2104 = vpop.f32.mrb[0].mxu0
        %v2105 = vadd.f32 %v1622, %v2104
        %v2106 = vpop.f32.mrb[0].mxu0
        %v2107 = vadd.f32 %v1627, %v2106
        %v2108 = vpop.f32.mrb[0].mxu0
        %v2109 = vadd.f32 %v1627, %v2108
        %2110 = vmatprep.mubr.bf16.mxu0 0
        %2111 = vmatmul.mubr.bf16.gmra.mrb[0].mxu0 %v1736
        %v2112 = vpop.f32.mrb[0].mxu0
        %v2113 = vadd.f32 %v1632, %v2112
        %v2114 = vpop.f32.mrb[0].mxu0
        %v2115 = vadd.f32 %v1632, %v2114
        %v2116 = vpop.f32.mrb[0].mxu0
        %v2117 = vadd.f32 %v1637, %v2116
        %v2118 = vpop.f32.mrb[0].mxu0
        %v2119 = vadd.f32 %v1637, %v2118
        %2120 = vmatprep.mubr.bf16.mxu0 0
        %2121 = vmatmul.mubr.bf16.gmra.mrb[0].mxu0 %v1737
        %v2122 = vpop.f32.mrb[0].mxu0
        %v2123 = vadd.f32 %v1642, %v2122
        %v2124 = vpop.f32.mrb[0].mxu0
        %v2125 = vadd.f32 %v1642, %v2124
        %v2126 = vpop.f32.mrb[0].mxu0
        %v2127 = vadd.f32 %v1647, %v2126
        %v2128 = vpop.f32.mrb[0].mxu0
        %v2129 = vadd.f32 %v1647, %v2128
        %2130 = vmatprep.mubr.bf16.mxu0 0
        %2131 = vmatmul.mubr.bf16.gmra.mrb[0].mxu0 %v1738
        %v2132 = vpop.f32.mrb[0].mxu0
        %v2133 = vadd.f32 %v1652, %v2132
        %v2134 = vpop.f32.mrb[0].mxu0
        %v2135 = vadd.f32 %v1652, %v2134
        %v2136 = vpop.f32.mrb[0].mxu0
        %v2137 = vadd.f32 %v1657, %v2136
        %v2138 = vpop.f32.mrb[0].mxu0
        %v2139 = vadd.f32 %v1657, %v2138
        %2140 = vdwg.mxu0
        %v2141 = vmax.f32 %v1790, 0.0
        %v2142 = vmax.f32 %v1792, 0.0
        %v2143 = vmax.f32 %v1983, 0.0
        %v2144 = vmax.f32 %v1985, 0.0
        %v2145 = vmax.f32 %v1794, 0.0
        %v2146 = vmax.f32 %v1796, 0.0
        %v2147 = vmax.f32 %v1987, 0.0
        %v2148 = vmax.f32 %v1989, 0.0
        %v2149 = vmax.f32 %v1800, 0.0
        %v2150 = vmax.f32 %v1802, 0.0
        %v2151 = vmax.f32 %v1993, 0.0
        %v2152 = vmax.f32 %v1995, 0.0
        %v2153 = vmax.f32 %v1804, 0.0
        %v2154 = vmax.f32 %v1806, 0.0
        %v2155 = vmax.f32 %v1997, 0.0
        %v2156 = vmax.f32 %v1999, 0.0
        %v2157 = vmax.f32 %v1810, 0.0
        %v2158 = vmax.f32 %v1812, 0.0
        %v2159 = vmax.f32 %v2003, 0.0
        %v2160 = vmax.f32 %v2005, 0.0
        %v2161 = vmax.f32 %v1814, 0.0
        %v2162 = vmax.f32 %v1816, 0.0
        %v2163 = vmax.f32 %v2007, 0.0
        %v2164 = vmax.f32 %v2009, 0.0
        %v2165 = vmax.f32 %v1820, 0.0
        %v2166 = vmax.f32 %v1822, 0.0
        %v2167 = vmax.f32 %v2013, 0.0
        %v2168 = vmax.f32 %v2015, 0.0
        %v2169 = vmax.f32 %v1824, 0.0
        %v2170 = vmax.f32 %v1826, 0.0
        %v2171 = vmax.f32 %v2017, 0.0
        %v2172 = vmax.f32 %v2019, 0.0
        %v2173 = vmax.f32 %v1830, 0.0
        %v2174 = vmax.f32 %v1832, 0.0
        %v2175 = vmax.f32 %v2023, 0.0
        %v2176 = vmax.f32 %v2025, 0.0
        %v2177 = vmax.f32 %v1834, 0.0
        %v2178 = vmax.f32 %v1836, 0.0
        %v2179 = vmax.f32 %v2027, 0.0
        %v2180 = vmax.f32 %v2029, 0.0
        %v2181 = vmax.f32 %v1840, 0.0
        %v2182 = vmax.f32 %v1842, 0.0
        %v2183 = vmax.f32 %v2033, 0.0
        %v2184 = vmax.f32 %v2035, 0.0
        %v2185 = vmax.f32 %v1844, 0.0
        %v2186 = vmax.f32 %v1846, 0.0
        %v2187 = vmax.f32 %v2037, 0.0
        %v2188 = vmax.f32 %v2039, 0.0
        %v2189 = vmax.f32 %v1850, 0.0
        %v2190 = vmax.f32 %v1852, 0.0
        %v2191 = vmax.f32 %v2043, 0.0
        %v2192 = vmax.f32 %v2045, 0.0
        %v2193 = vmax.f32 %v1854, 0.0
        %v2194 = vmax.f32 %v1856, 0.0
        %v2195 = vmax.f32 %v2047, 0.0
        %v2196 = vmax.f32 %v2049, 0.0
        %v2197 = vmax.f32 %v1860, 0.0
        %v2198 = vmax.f32 %v1862, 0.0
        %v2199 = vmax.f32 %v2053, 0.0
        %v2200 = vmax.f32 %v2055, 0.0
        %v2201 = vmax.f32 %v1864, 0.0
        %v2202 = vmax.f32 %v1866, 0.0
        %v2203 = vmax.f32 %v2057, 0.0
        %v2204 = vmax.f32 %v2059, 0.0
        %v2205 = vmax.f32 %v1870, 0.0
        %v2206 = vmax.f32 %v1872, 0.0
        %v2207 = vmax.f32 %v2063, 0.0
        %v2208 = vmax.f32 %v2065, 0.0
        %v2209 = vmax.f32 %v1874, 0.0
        %v2210 = vmax.f32 %v1876, 0.0
        %v2211 = vmax.f32 %v2067, 0.0
        %v2212 = vmax.f32 %v2069, 0.0
        %v2213 = vmax.f32 %v1880, 0.0
        %v2214 = vmax.f32 %v1882, 0.0
        %v2215 = vmax.f32 %v2073, 0.0
        %v2216 = vmax.f32 %v2075, 0.0
        %v2217 = vmax.f32 %v1884, 0.0
        %v2218 = vmax.f32 %v1886, 0.0
        %v2219 = vmax.f32 %v2077, 0.0
        %v2220 = vmax.f32 %v2079, 0.0
        %v2221 = vmax.f32 %v1890, 0.0
        %v2222 = vmax.f32 %v1892, 0.0
        %v2223 = vmax.f32 %v2083, 0.0
        %v2224 = vmax.f32 %v2085, 0.0
        %v2225 = vmax.f32 %v1894, 0.0
        %v2226 = vmax.f32 %v1896, 0.0
        %v2227 = vmax.f32 %v2087, 0.0
        %v2228 = vmax.f32 %v2089, 0.0
        %v2229 = vmax.f32 %v1900, 0.0
        %v2230 = vmax.f32 %v1902, 0.0
        %v2231 = vmax.f32 %v2093, 0.0
        %v2232 = vmax.f32 %v2095, 0.0
        %v2233 = vmax.f32 %v1904, 0.0
        %v2234 = vmax.f32 %v1906, 0.0
        %v2235 = vmax.f32 %v2097, 0.0
        %v2236 = vmax.f32 %v2099, 0.0
        %v2237 = vmax.f32 %v1910, 0.0
        %v2238 = vmax.f32 %v1912, 0.0
        %v2239 = vmax.f32 %v2103, 0.0
        %v2240 = vmax.f32 %v2105, 0.0
        %v2241 = vmax.f32 %v1914, 0.0
        %v2242 = vmax.f32 %v1916, 0.0
        %v2243 = vmax.f32 %v2107, 0.0
        %v2244 = vmax.f32 %v2109, 0.0
        %v2245 = vmax.f32 %v1920, 0.0
        %v2246 = vmax.f32 %v1922, 0.0
        %v2247 = vmax.f32 %v2113, 0.0
        %v2248 = vmax.f32 %v2115, 0.0
        %v2249 = vmax.f32 %v1924, 0.0
        %v2250 = vmax.f32 %v1926, 0.0
        %v2251 = vmax.f32 %v2117, 0.0
        %v2252 = vmax.f32 %v2119, 0.0
        %v2253 = vmax.f32 %v1930, 0.0
        %v2254 = vmax.f32 %v1932, 0.0
        %v2255 = vmax.f32 %v2123, 0.0
        %v2256 = vmax.f32 %v2125, 0.0
        %v2257 = vmax.f32 %v1934, 0.0
        %v2258 = vmax.f32 %v1936, 0.0
        %v2259 = vmax.f32 %v2127, 0.0
        %v2260 = vmax.f32 %v2129, 0.0
        %v2261 = vmax.f32 %v1940, 0.0
        %v2262 = vmax.f32 %v1942, 0.0
        %v2263 = vmax.f32 %v2133, 0.0
        %v2264 = vmax.f32 %v2135, 0.0
        %v2265 = vmax.f32 %v1944, 0.0
        %v2266 = vmax.f32 %v1946, 0.0
        %v2267 = vmax.f32 %v2137, 0.0
        %v2268 = vmax.f32 %v2139, 0.0
        %2269 = vst [vmem:[%s292] sm:$0xff] %v2141
        %2270 = vst [vmem:[%s292 + $0x8] sm:$0xff] %v2142
        %2271 = vst [vmem:[%s292 + $0x10] sm:$0xff] %v2143
        %2272 = vst [vmem:[%s292 + $0x18] sm:$0xff] %v2144
        %2273 = vst [vmem:[%s292 + $0x20] sm:$0xff] %v2145
        %2274 = vst [vmem:[%s292 + $0x28] sm:$0xff] %v2146
        %2275 = vst [vmem:[%s292 + $0x30] sm:$0xff] %v2147
        %2276 = vst [vmem:[%s292 + $0x38] sm:$0xff] %v2148
        %2277 = vst [vmem:[%s292 + $0x40] sm:$0xff] %v2149
        %2278 = vst [vmem:[%s292 + $0x48] sm:$0xff] %v2150
        %2279 = vst [vmem:[%s292 + $0x50] sm:$0xff] %v2151
        %2280 = vst [vmem:[%s292 + $0x58] sm:$0xff] %v2152
        %2281 = vst [vmem:[%s292 + $0x60] sm:$0xff] %v2153
        %2282 = vst [vmem:[%s292 + $0x68] sm:$0xff] %v2154
        %2283 = vst [vmem:[%s292 + $0x70] sm:$0xff] %v2155
        %2284 = vst [vmem:[%s292 + $0x78] sm:$0xff] %v2156
        %2285 = vst [vmem:[%s292 + $0x80] sm:$0xff] %v2157
        %2286 = vst [vmem:[%s292 + $0x88] sm:$0xff] %v2158
        %2287 = vst [vmem:[%s292 + $0x90] sm:$0xff] %v2159
        %2288 = vst [vmem:[%s292 + $0x98] sm:$0xff] %v2160
        %2289 = vst [vmem:[%s292 + $0xa0] sm:$0xff] %v2161
        %2290 = vst [vmem:[%s292 + $0xa8] sm:$0xff] %v2162
        %2291 = vst [vmem:[%s292 + $0xb0] sm:$0xff] %v2163
        %2292 = vst [vmem:[%s292 + $0xb8] sm:$0xff] %v2164
        %2293 = vst [vmem:[%s292 + $0xc0] sm:$0xff] %v2165
        %2294 = vst [vmem:[%s292 + $0xc8] sm:$0xff] %v2166
        %2295 = vst [vmem:[%s292 + $0xd0] sm:$0xff] %v2167
        %2296 = vst [vmem:[%s292 + $0xd8] sm:$0xff] %v2168
        %2297 = vst [vmem:[%s292 + $0xe0] sm:$0xff] %v2169
        %2298 = vst [vmem:[%s292 + $0xe8] sm:$0xff] %v2170
        %2299 = vst [vmem:[%s292 + $0xf0] sm:$0xff] %v2171
        %2300 = vst [vmem:[%s292 + $0xf8] sm:$0xff] %v2172
        %2301 = vst [vmem:[%s292 + $0x100] sm:$0xff] %v2173
        %2302 = vst [vmem:[%s292 + $0x108] sm:$0xff] %v2174
        %2303 = vst [vmem:[%s292 + $0x110] sm:$0xff] %v2175
        %2304 = vst [vmem:[%s292 + $0x118] sm:$0xff] %v2176
        %2305 = vst [vmem:[%s292 + $0x120] sm:$0xff] %v2177
        %2306 = vst [vmem:[%s292 + $0x128] sm:$0xff] %v2178
        %2307 = vst [vmem:[%s292 + $0x130] sm:$0xff] %v2179
        %2308 = vst [vmem:[%s292 + $0x138] sm:$0xff] %v2180
        %2309 = vst [vmem:[%s292 + $0x140] sm:$0xff] %v2181
        %2310 = vst [vmem:[%s292 + $0x148] sm:$0xff] %v2182
        %2311 = vst [vmem:[%s292 + $0x150] sm:$0xff] %v2183
        %2312 = vst [vmem:[%s292 + $0x158] sm:$0xff] %v2184
        %2313 = vst [vmem:[%s292 + $0x160] sm:$0xff] %v2185
        %2314 = vst [vmem:[%s292 + $0x168] sm:$0xff] %v2186
        %2315 = vst [vmem:[%s292 + $0x170] sm:$0xff] %v2187
        %2316 = vst [vmem:[%s292 + $0x178] sm:$0xff] %v2188
        %2317 = vst [vmem:[%s292 + $0x180] sm:$0xff] %v2189
        %2318 = vst [vmem:[%s292 + $0x188] sm:$0xff] %v2190
        %2319 = vst [vmem:[%s292 + $0x190] sm:$0xff] %v2191
        %2320 = vst [vmem:[%s292 + $0x198] sm:$0xff] %v2192
        %2321 = vst [vmem:[%s292 + $0x1a0] sm:$0xff] %v2193
        %2322 = vst [vmem:[%s292 + $0x1a8] sm:$0xff] %v2194
        %2323 = vst [vmem:[%s292 + $0x1b0] sm:$0xff] %v2195
        %2324 = vst [vmem:[%s292 + $0x1b8] sm:$0xff] %v2196
        %2325 = vst [vmem:[%s292 + $0x1c0] sm:$0xff] %v2197
        %2326 = vst [vmem:[%s292 + $0x1c8] sm:$0xff] %v2198
        %2327 = vst [vmem:[%s292 + $0x1d0] sm:$0xff] %v2199
        %2328 = vst [vmem:[%s292 + $0x1d8] sm:$0xff] %v2200
        %2329 = vst [vmem:[%s292 + $0x1e0] sm:$0xff] %v2201
        %2330 = vst [vmem:[%s292 + $0x1e8] sm:$0xff] %v2202
        %2331 = vst [vmem:[%s292 + $0x1f0] sm:$0xff] %v2203
        %2332 = vst [vmem:[%s292 + $0x1f8] sm:$0xff] %v2204
        %2333 = vst [vmem:[%s292 + $0x200] sm:$0xff] %v2205
        %2334 = vst [vmem:[%s292 + $0x208] sm:$0xff] %v2206
        %2335 = vst [vmem:[%s292 + $0x210] sm:$0xff] %v2207
        %2336 = vst [vmem:[%s292 + $0x218] sm:$0xff] %v2208
        %2337 = vst [vmem:[%s292 + $0x220] sm:$0xff] %v2209
        %2338 = vst [vmem:[%s292 + $0x228] sm:$0xff] %v2210
        %2339 = vst [vmem:[%s292 + $0x230] sm:$0xff] %v2211
        %2340 = vst [vmem:[%s292 + $0x238] sm:$0xff] %v2212
        %2341 = vst [vmem:[%s292 + $0x240] sm:$0xff] %v2213
        %2342 = vst [vmem:[%s292 + $0x248] sm:$0xff] %v2214
        %2343 = vst [vmem:[%s292 + $0x250] sm:$0xff] %v2215
        %2344 = vst [vmem:[%s292 + $0x258] sm:$0xff] %v2216
        %2345 = vst [vmem:[%s292 + $0x260] sm:$0xff] %v2217
        %2346 = vst [vmem:[%s292 + $0x268] sm:$0xff] %v2218
        %2347 = vst [vmem:[%s292 + $0x270] sm:$0xff] %v2219
        %2348 = vst [vmem:[%s292 + $0x278] sm:$0xff] %v2220
        %2349 = vst [vmem:[%s292 + $0x280] sm:$0xff] %v2221
        %2350 = vst [vmem:[%s292 + $0x288] sm:$0xff] %v2222
        %2351 = vst [vmem:[%s292 + $0x290] sm:$0xff] %v2223
        %2352 = vst [vmem:[%s292 + $0x298] sm:$0xff] %v2224
        %2353 = vst [vmem:[%s292 + $0x2a0] sm:$0xff] %v2225
        %2354 = vst [vmem:[%s292 + $0x2a8] sm:$0xff] %v2226
        %2355 = vst [vmem:[%s292 + $0x2b0] sm:$0xff] %v2227
        %2356 = vst [vmem:[%s292 + $0x2b8] sm:$0xff] %v2228
        %2357 = vst [vmem:[%s292 + $0x2c0] sm:$0xff] %v2229
        %2358 = vst [vmem:[%s292 + $0x2c8] sm:$0xff] %v2230
        %2359 = vst [vmem:[%s292 + $0x2d0] sm:$0xff] %v2231
        %2360 = vst [vmem:[%s292 + $0x2d8] sm:$0xff] %v2232
        %2361 = vst [vmem:[%s292 + $0x2e0] sm:$0xff] %v2233
        %2362 = vst [vmem:[%s292 + $0x2e8] sm:$0xff] %v2234
        %2363 = vst [vmem:[%s292 + $0x2f0] sm:$0xff] %v2235
        %2364 = vst [vmem:[%s292 + $0x2f8] sm:$0xff] %v2236
        %2365 = vst [vmem:[%s292 + $0x300] sm:$0xff] %v2237
        %2366 = vst [vmem:[%s292 + $0x308] sm:$0xff] %v2238
        %2367 = vst [vmem:[%s292 + $0x310] sm:$0xff] %v2239
        %2368 = vst [vmem:[%s292 + $0x318] sm:$0xff] %v2240
        %2369 = vst [vmem:[%s292 + $0x320] sm:$0xff] %v2241
        %2370 = vst [vmem:[%s292 + $0x328] sm:$0xff] %v2242
        %2371 = vst [vmem:[%s292 + $0x330] sm:$0xff] %v2243
        %2372 = vst [vmem:[%s292 + $0x338] sm:$0xff] %v2244
        %2373 = vst [vmem:[%s292 + $0x340] sm:$0xff] %v2245
        %2374 = vst [vmem:[%s292 + $0x348] sm:$0xff] %v2246
        %2375 = vst [vmem:[%s292 + $0x350] sm:$0xff] %v2247
        %2376 = vst [vmem:[%s292 + $0x358] sm:$0xff] %v2248
        %2377 = vst [vmem:[%s292 + $0x360] sm:$0xff] %v2249
        %2378 = vst [vmem:[%s292 + $0x368] sm:$0xff] %v2250
        %2379 = vst [vmem:[%s292 + $0x370] sm:$0xff] %v2251
        %2380 = vst [vmem:[%s292 + $0x378] sm:$0xff] %v2252
        %2381 = vst [vmem:[%s292 + $0x380] sm:$0xff] %v2253
        %2382 = vst [vmem:[%s292 + $0x388] sm:$0xff] %v2254
        %2383 = vst [vmem:[%s292 + $0x390] sm:$0xff] %v2255
        %2384 = vst [vmem:[%s292 + $0x398] sm:$0xff] %v2256
        %2385 = vst [vmem:[%s292 + $0x3a0] sm:$0xff] %v2257
        %2386 = vst [vmem:[%s292 + $0x3a8] sm:$0xff] %v2258
        %2387 = vst [vmem:[%s292 + $0x3b0] sm:$0xff] %v2259
        %2388 = vst [vmem:[%s292 + $0x3b8] sm:$0xff] %v2260
        %2389 = vst [vmem:[%s292 + $0x3c0] sm:$0xff] %v2261
        %2390 = vst [vmem:[%s292 + $0x3c8] sm:$0xff] %v2262
        %2391 = vst [vmem:[%s292 + $0x3d0] sm:$0xff] %v2263
        %2392 = vst [vmem:[%s292 + $0x3d8] sm:$0xff] %v2264
        %2393 = vst [vmem:[%s292 + $0x3e0] sm:$0xff] %v2265
        %2394 = vst [vmem:[%s292 + $0x3e8] sm:$0xff] %v2266
        %2395 = vst [vmem:[%s292 + $0x3f0] sm:$0xff] %v2267
        %2396 = vst [vmem:[%s292 + $0x3f8] sm:$0xff] %v2268
        %s2397 = sand.u32 %s194, 1
        %s2398 = sand.u32 %s194, 1
        %s2399 = smul.addr %s2398, 1024
        %s2400 = scalar_lea.vmem [#allocation4], %s2399
        // Predicated region
        $region49: #{plainnet_forward.1} parent=47 // pred_check
          %p2401 = pneg %p204
        $region50: #{plainnet_forward.1} parent=47 // pred_check_branch
          %2403 = sbr.rel (%p2401) target = $region52
        $region51: #{plainnet_forward.1} parent=47 // pred_region
          %s2404 = smul.u32 4, %s23
          %s2405 = smul.addr %s22, 256
          %s2406 = sadd.s32 %s2404, %s2405
          %s2407 = smul.addr %s2406, 8
          %s2408 = scalar_lea.vmem %s7, %s2407
          // Predicated region
          $region53: #{plainnet_forward.1} parent=51 // pred_check
            _
          $region54: #{plainnet_forward.1} parent=51 // pred_check_branch
            %2410 = sbr.rel (0) target = $region56
          $region55: #{plainnet_forward.1} parent=51 // pred_region
            // Predicated region
            $region57: #{plainnet_forward.1} parent=55 // pred_check
              _
            $region58: #{plainnet_forward.1} parent=55 // pred_check_branch
              %2412 = sbr.rel (0) target = $region60
            $region59: #{plainnet_forward.1} parent=55 // pred_region
              loop: start=0, step=1, limit=1
              $region61: #{plainnet_forward.1} parent=59 // loop_pre_header
                _
              $region62: #{plainnet_forward.1} parent=59 // loop_header
                %s2414 = sphi 0, %s2418
                %p2415 = scmp.ge.s32.totalorder %s2414, 1
                %s2419 = sphi %s2400, %s2400
                %s2420 = sphi %s2408, %s2408
              $region63: #{plainnet_forward.1} parent=59 // loop_header_branch
                %2417 = sbr.rel (%p2415) target = $region67
              $region64: #{plainnet_forward.1} parent=59 // loop_body
                %v2421 = vld [vmem:[%s2419] sm:$0xff]
                %2422 = vst [vmem:[%s2420] sm:$0xff] %v2421
                %v2423 = vld [vmem:[%s2419 + $0x8] sm:$0xff]
                %2424 = vst [vmem:[%s2420 + $0x8] sm:$0xff] %v2423
                %v2425 = vld [vmem:[%s2419 + $0x10] sm:$0xff]
                %2426 = vst [vmem:[%s2420 + $0x10] sm:$0xff] %v2425
                %v2427 = vld [vmem:[%s2419 + $0x18] sm:$0xff]
                %2428 = vst [vmem:[%s2420 + $0x18] sm:$0xff] %v2427
                %v2429 = vld [vmem:[%s2419 + $0x20] sm:$0xff]
                %2430 = vst [vmem:[%s2420 + $0x40] sm:$0xff] %v2429
                %v2431 = vld [vmem:[%s2419 + $0x28] sm:$0xff]
                %2432 = vst [vmem:[%s2420 + $0x48] sm:$0xff] %v2431
                %v2433 = vld [vmem:[%s2419 + $0x30] sm:$0xff]
                %2434 = vst [vmem:[%s2420 + $0x50] sm:$0xff] %v2433
                %v2435 = vld [vmem:[%s2419 + $0x38] sm:$0xff]
                %2436 = vst [vmem:[%s2420 + $0x58] sm:$0xff] %v2435
                %v2437 = vld [vmem:[%s2419 + $0x40] sm:$0xff]
                %2438 = vst [vmem:[%s2420 + $0x80] sm:$0xff] %v2437
                %v2439 = vld [vmem:[%s2419 + $0x48] sm:$0xff]
                %2440 = vst [vmem:[%s2420 + $0x88] sm:$0xff] %v2439
                %v2441 = vld [vmem:[%s2419 + $0x50] sm:$0xff]
                %2442 = vst [vmem:[%s2420 + $0x90] sm:$0xff] %v2441
                %v2443 = vld [vmem:[%s2419 + $0x58] sm:$0xff]
                %2444 = vst [vmem:[%s2420 + $0x98] sm:$0xff] %v2443
                %v2445 = vld [vmem:[%s2419 + $0x60] sm:$0xff]
                %2446 = vst [vmem:[%s2420 + $0xc0] sm:$0xff] %v2445
                %v2447 = vld [vmem:[%s2419 + $0x68] sm:$0xff]
                %2448 = vst [vmem:[%s2420 + $0xc8] sm:$0xff] %v2447
                %v2449 = vld [vmem:[%s2419 + $0x70] sm:$0xff]
                %2450 = vst [vmem:[%s2420 + $0xd0] sm:$0xff] %v2449
                %v2451 = vld [vmem:[%s2419 + $0x78] sm:$0xff]
                %2452 = vst [vmem:[%s2420 + $0xd8] sm:$0xff] %v2451
                %v2453 = vld [vmem:[%s2419 + $0x80] sm:$0xff]
                %2454 = vst [vmem:[%s2420 + $0x100] sm:$0xff] %v2453
                %v2455 = vld [vmem:[%s2419 + $0x88] sm:$0xff]
                %2456 = vst [vmem:[%s2420 + $0x108] sm:$0xff] %v2455
                %v2457 = vld [vmem:[%s2419 + $0x90] sm:$0xff]
                %2458 = vst [vmem:[%s2420 + $0x110] sm:$0xff] %v2457
                %v2459 = vld [vmem:[%s2419 + $0x98] sm:$0xff]
                %2460 = vst [vmem:[%s2420 + $0x118] sm:$0xff] %v2459
                %v2461 = vld [vmem:[%s2419 + $0xa0] sm:$0xff]
                %2462 = vst [vmem:[%s2420 + $0x140] sm:$0xff] %v2461
                %v2463 = vld [vmem:[%s2419 + $0xa8] sm:$0xff]
                %2464 = vst [vmem:[%s2420 + $0x148] sm:$0xff] %v2463
                %v2465 = vld [vmem:[%s2419 + $0xb0] sm:$0xff]
                %2466 = vst [vmem:[%s2420 + $0x150] sm:$0xff] %v2465
                %v2467 = vld [vmem:[%s2419 + $0xb8] sm:$0xff]
                %2468 = vst [vmem:[%s2420 + $0x158] sm:$0xff] %v2467
                %v2469 = vld [vmem:[%s2419 + $0xc0] sm:$0xff]
                %2470 = vst [vmem:[%s2420 + $0x180] sm:$0xff] %v2469
                %v2471 = vld [vmem:[%s2419 + $0xc8] sm:$0xff]
                %2472 = vst [vmem:[%s2420 + $0x188] sm:$0xff] %v2471
                %v2473 = vld [vmem:[%s2419 + $0xd0] sm:$0xff]
                %2474 = vst [vmem:[%s2420 + $0x190] sm:$0xff] %v2473
                %v2475 = vld [vmem:[%s2419 + $0xd8] sm:$0xff]
                %2476 = vst [vmem:[%s2420 + $0x198] sm:$0xff] %v2475
                %v2477 = vld [vmem:[%s2419 + $0xe0] sm:$0xff]
                %2478 = vst [vmem:[%s2420 + $0x1c0] sm:$0xff] %v2477
                %v2479 = vld [vmem:[%s2419 + $0xe8] sm:$0xff]
                %2480 = vst [vmem:[%s2420 + $0x1c8] sm:$0xff] %v2479
                %v2481 = vld [vmem:[%s2419 + $0xf0] sm:$0xff]
                %2482 = vst [vmem:[%s2420 + $0x1d0] sm:$0xff] %v2481
                %v2483 = vld [vmem:[%s2419 + $0xf8] sm:$0xff]
                %2484 = vst [vmem:[%s2420 + $0x1d8] sm:$0xff] %v2483
                %v2485 = vld [vmem:[%s2419 + $0x100] sm:$0xff]
                %2486 = vst [vmem:[%s2420 + $0x200] sm:$0xff] %v2485
                %v2487 = vld [vmem:[%s2419 + $0x108] sm:$0xff]
                %2488 = vst [vmem:[%s2420 + $0x208] sm:$0xff] %v2487
                %v2489 = vld [vmem:[%s2419 + $0x110] sm:$0xff]
                %2490 = vst [vmem:[%s2420 + $0x210] sm:$0xff] %v2489
                %v2491 = vld [vmem:[%s2419 + $0x118] sm:$0xff]
                %2492 = vst [vmem:[%s2420 + $0x218] sm:$0xff] %v2491
                %v2493 = vld [vmem:[%s2419 + $0x120] sm:$0xff]
                %2494 = vst [vmem:[%s2420 + $0x240] sm:$0xff] %v2493
                %v2495 = vld [vmem:[%s2419 + $0x128] sm:$0xff]
                %2496 = vst [vmem:[%s2420 + $0x248] sm:$0xff] %v2495
                %v2497 = vld [vmem:[%s2419 + $0x130] sm:$0xff]
                %2498 = vst [vmem:[%s2420 + $0x250] sm:$0xff] %v2497
                %v2499 = vld [vmem:[%s2419 + $0x138] sm:$0xff]
                %2500 = vst [vmem:[%s2420 + $0x258] sm:$0xff] %v2499
                %v2501 = vld [vmem:[%s2419 + $0x140] sm:$0xff]
                %2502 = vst [vmem:[%s2420 + $0x280] sm:$0xff] %v2501
                %v2503 = vld [vmem:[%s2419 + $0x148] sm:$0xff]
                %2504 = vst [vmem:[%s2420 + $0x288] sm:$0xff] %v2503
                %v2505 = vld [vmem:[%s2419 + $0x150] sm:$0xff]
                %2506 = vst [vmem:[%s2420 + $0x290] sm:$0xff] %v2505
                %v2507 = vld [vmem:[%s2419 + $0x158] sm:$0xff]
                %2508 = vst [vmem:[%s2420 + $0x298] sm:$0xff] %v2507
                %v2509 = vld [vmem:[%s2419 + $0x160] sm:$0xff]
                %2510 = vst [vmem:[%s2420 + $0x2c0] sm:$0xff] %v2509
                %v2511 = vld [vmem:[%s2419 + $0x168] sm:$0xff]
                %2512 = vst [vmem:[%s2420 + $0x2c8] sm:$0xff] %v2511
                %v2513 = vld [vmem:[%s2419 + $0x170] sm:$0xff]
                %2514 = vst [vmem:[%s2420 + $0x2d0] sm:$0xff] %v2513
                %v2515 = vld [vmem:[%s2419 + $0x178] sm:$0xff]
                %2516 = vst [vmem:[%s2420 + $0x2d8] sm:$0xff] %v2515
                %v2517 = vld [vmem:[%s2419 + $0x180] sm:$0xff]
                %2518 = vst [vmem:[%s2420 + $0x300] sm:$0xff] %v2517
                %v2519 = vld [vmem:[%s2419 + $0x188] sm:$0xff]
                %2520 = vst [vmem:[%s2420 + $0x308] sm:$0xff] %v2519
                %v2521 = vld [vmem:[%s2419 + $0x190] sm:$0xff]
                %2522 = vst [vmem:[%s2420 + $0x310] sm:$0xff] %v2521
                %v2523 = vld [vmem:[%s2419 + $0x198] sm:$0xff]
                %2524 = vst [vmem:[%s2420 + $0x318] sm:$0xff] %v2523
                %v2525 = vld [vmem:[%s2419 + $0x1a0] sm:$0xff]
                %2526 = vst [vmem:[%s2420 + $0x340] sm:$0xff] %v2525
                %v2527 = vld [vmem:[%s2419 + $0x1a8] sm:$0xff]
                %2528 = vst [vmem:[%s2420 + $0x348] sm:$0xff] %v2527
                %v2529 = vld [vmem:[%s2419 + $0x1b0] sm:$0xff]
                %2530 = vst [vmem:[%s2420 + $0x350] sm:$0xff] %v2529
                %v2531 = vld [vmem:[%s2419 + $0x1b8] sm:$0xff]
                %2532 = vst [vmem:[%s2420 + $0x358] sm:$0xff] %v2531
                %v2533 = vld [vmem:[%s2419 + $0x1c0] sm:$0xff]
                %2534 = vst [vmem:[%s2420 + $0x380] sm:$0xff] %v2533
                %v2535 = vld [vmem:[%s2419 + $0x1c8] sm:$0xff]
                %2536 = vst [vmem:[%s2420 + $0x388] sm:$0xff] %v2535
                %v2537 = vld [vmem:[%s2419 + $0x1d0] sm:$0xff]
                %2538 = vst [vmem:[%s2420 + $0x390] sm:$0xff] %v2537
                %v2539 = vld [vmem:[%s2419 + $0x1d8] sm:$0xff]
                %2540 = vst [vmem:[%s2420 + $0x398] sm:$0xff] %v2539
                %v2541 = vld [vmem:[%s2419 + $0x1e0] sm:$0xff]
                %2542 = vst [vmem:[%s2420 + $0x3c0] sm:$0xff] %v2541
                %v2543 = vld [vmem:[%s2419 + $0x1e8] sm:$0xff]
                %2544 = vst [vmem:[%s2420 + $0x3c8] sm:$0xff] %v2543
                %v2545 = vld [vmem:[%s2419 + $0x1f0] sm:$0xff]
                %2546 = vst [vmem:[%s2420 + $0x3d0] sm:$0xff] %v2545
                %v2547 = vld [vmem:[%s2419 + $0x1f8] sm:$0xff]
                %2548 = vst [vmem:[%s2420 + $0x3d8] sm:$0xff] %v2547
                %v2549 = vld [vmem:[%s2419 + $0x200] sm:$0xff]
                %2550 = vst [vmem:[%s2420 + $0x400] sm:$0xff] %v2549
                %v2551 = vld [vmem:[%s2419 + $0x208] sm:$0xff]
                %2552 = vst [vmem:[%s2420 + $0x408] sm:$0xff] %v2551
                %v2553 = vld [vmem:[%s2419 + $0x210] sm:$0xff]
                %2554 = vst [vmem:[%s2420 + $0x410] sm:$0xff] %v2553
                %v2555 = vld [vmem:[%s2419 + $0x218] sm:$0xff]
                %2556 = vst [vmem:[%s2420 + $0x418] sm:$0xff] %v2555
                %v2557 = vld [vmem:[%s2419 + $0x220] sm:$0xff]
                %2558 = vst [vmem:[%s2420 + $0x440] sm:$0xff] %v2557
                %v2559 = vld [vmem:[%s2419 + $0x228] sm:$0xff]
                %2560 = vst [vmem:[%s2420 + $0x448] sm:$0xff] %v2559
                %v2561 = vld [vmem:[%s2419 + $0x230] sm:$0xff]
                %2562 = vst [vmem:[%s2420 + $0x450] sm:$0xff] %v2561
                %v2563 = vld [vmem:[%s2419 + $0x238] sm:$0xff]
                %2564 = vst [vmem:[%s2420 + $0x458] sm:$0xff] %v2563
                %v2565 = vld [vmem:[%s2419 + $0x240] sm:$0xff]
                %2566 = vst [vmem:[%s2420 + $0x480] sm:$0xff] %v2565
                %v2567 = vld [vmem:[%s2419 + $0x248] sm:$0xff]
                %2568 = vst [vmem:[%s2420 + $0x488] sm:$0xff] %v2567
                %v2569 = vld [vmem:[%s2419 + $0x250] sm:$0xff]
                %2570 = vst [vmem:[%s2420 + $0x490] sm:$0xff] %v2569
                %v2571 = vld [vmem:[%s2419 + $0x258] sm:$0xff]
                %2572 = vst [vmem:[%s2420 + $0x498] sm:$0xff] %v2571
                %v2573 = vld [vmem:[%s2419 + $0x260] sm:$0xff]
                %2574 = vst [vmem:[%s2420 + $0x4c0] sm:$0xff] %v2573
                %v2575 = vld [vmem:[%s2419 + $0x268] sm:$0xff]
                %2576 = vst [vmem:[%s2420 + $0x4c8] sm:$0xff] %v2575
                %v2577 = vld [vmem:[%s2419 + $0x270] sm:$0xff]
                %2578 = vst [vmem:[%s2420 + $0x4d0] sm:$0xff] %v2577
                %v2579 = vld [vmem:[%s2419 + $0x278] sm:$0xff]
                %2580 = vst [vmem:[%s2420 + $0x4d8] sm:$0xff] %v2579
                %v2581 = vld [vmem:[%s2419 + $0x280] sm:$0xff]
                %2582 = vst [vmem:[%s2420 + $0x500] sm:$0xff] %v2581
                %v2583 = vld [vmem:[%s2419 + $0x288] sm:$0xff]
                %2584 = vst [vmem:[%s2420 + $0x508] sm:$0xff] %v2583
                %v2585 = vld [vmem:[%s2419 + $0x290] sm:$0xff]
                %2586 = vst [vmem:[%s2420 + $0x510] sm:$0xff] %v2585
                %v2587 = vld [vmem:[%s2419 + $0x298] sm:$0xff]
                %2588 = vst [vmem:[%s2420 + $0x518] sm:$0xff] %v2587
                %v2589 = vld [vmem:[%s2419 + $0x2a0] sm:$0xff]
                %2590 = vst [vmem:[%s2420 + $0x540] sm:$0xff] %v2589
                %v2591 = vld [vmem:[%s2419 + $0x2a8] sm:$0xff]
                %2592 = vst [vmem:[%s2420 + $0x548] sm:$0xff] %v2591
                %v2593 = vld [vmem:[%s2419 + $0x2b0] sm:$0xff]
                %2594 = vst [vmem:[%s2420 + $0x550] sm:$0xff] %v2593
                %v2595 = vld [vmem:[%s2419 + $0x2b8] sm:$0xff]
                %2596 = vst [vmem:[%s2420 + $0x558] sm:$0xff] %v2595
                %v2597 = vld [vmem:[%s2419 + $0x2c0] sm:$0xff]
                %2598 = vst [vmem:[%s2420 + $0x580] sm:$0xff] %v2597
                %v2599 = vld [vmem:[%s2419 + $0x2c8] sm:$0xff]
                %2600 = vst [vmem:[%s2420 + $0x588] sm:$0xff] %v2599
                %v2601 = vld [vmem:[%s2419 + $0x2d0] sm:$0xff]
                %2602 = vst [vmem:[%s2420 + $0x590] sm:$0xff] %v2601
                %v2603 = vld [vmem:[%s2419 + $0x2d8] sm:$0xff]
                %2604 = vst [vmem:[%s2420 + $0x598] sm:$0xff] %v2603
                %v2605 = vld [vmem:[%s2419 + $0x2e0] sm:$0xff]
                %2606 = vst [vmem:[%s2420 + $0x5c0] sm:$0xff] %v2605
                %v2607 = vld [vmem:[%s2419 + $0x2e8] sm:$0xff]
                %2608 = vst [vmem:[%s2420 + $0x5c8] sm:$0xff] %v2607
                %v2609 = vld [vmem:[%s2419 + $0x2f0] sm:$0xff]
                %2610 = vst [vmem:[%s2420 + $0x5d0] sm:$0xff] %v2609
                %v2611 = vld [vmem:[%s2419 + $0x2f8] sm:$0xff]
                %2612 = vst [vmem:[%s2420 + $0x5d8] sm:$0xff] %v2611
                %v2613 = vld [vmem:[%s2419 + $0x300] sm:$0xff]
                %2614 = vst [vmem:[%s2420 + $0x600] sm:$0xff] %v2613
                %v2615 = vld [vmem:[%s2419 + $0x308] sm:$0xff]
                %2616 = vst [vmem:[%s2420 + $0x608] sm:$0xff] %v2615
                %v2617 = vld [vmem:[%s2419 + $0x310] sm:$0xff]
                %2618 = vst [vmem:[%s2420 + $0x610] sm:$0xff] %v2617
                %v2619 = vld [vmem:[%s2419 + $0x318] sm:$0xff]
                %2620 = vst [vmem:[%s2420 + $0x618] sm:$0xff] %v2619
                %v2621 = vld [vmem:[%s2419 + $0x320] sm:$0xff]
                %2622 = vst [vmem:[%s2420 + $0x640] sm:$0xff] %v2621
                %v2623 = vld [vmem:[%s2419 + $0x328] sm:$0xff]
                %2624 = vst [vmem:[%s2420 + $0x648] sm:$0xff] %v2623
                %v2625 = vld [vmem:[%s2419 + $0x330] sm:$0xff]
                %2626 = vst [vmem:[%s2420 + $0x650] sm:$0xff] %v2625
                %v2627 = vld [vmem:[%s2419 + $0x338] sm:$0xff]
                %2628 = vst [vmem:[%s2420 + $0x658] sm:$0xff] %v2627
                %v2629 = vld [vmem:[%s2419 + $0x340] sm:$0xff]
                %2630 = vst [vmem:[%s2420 + $0x680] sm:$0xff] %v2629
                %v2631 = vld [vmem:[%s2419 + $0x348] sm:$0xff]
                %2632 = vst [vmem:[%s2420 + $0x688] sm:$0xff] %v2631
                %v2633 = vld [vmem:[%s2419 + $0x350] sm:$0xff]
                %2634 = vst [vmem:[%s2420 + $0x690] sm:$0xff] %v2633
                %v2635 = vld [vmem:[%s2419 + $0x358] sm:$0xff]
                %2636 = vst [vmem:[%s2420 + $0x698] sm:$0xff] %v2635
                %v2637 = vld [vmem:[%s2419 + $0x360] sm:$0xff]
                %2638 = vst [vmem:[%s2420 + $0x6c0] sm:$0xff] %v2637
                %v2639 = vld [vmem:[%s2419 + $0x368] sm:$0xff]
                %2640 = vst [vmem:[%s2420 + $0x6c8] sm:$0xff] %v2639
                %v2641 = vld [vmem:[%s2419 + $0x370] sm:$0xff]
                %2642 = vst [vmem:[%s2420 + $0x6d0] sm:$0xff] %v2641
                %v2643 = vld [vmem:[%s2419 + $0x378] sm:$0xff]
                %2644 = vst [vmem:[%s2420 + $0x6d8] sm:$0xff] %v2643
                %v2645 = vld [vmem:[%s2419 + $0x380] sm:$0xff]
                %2646 = vst [vmem:[%s2420 + $0x700] sm:$0xff] %v2645
                %v2647 = vld [vmem:[%s2419 + $0x388] sm:$0xff]
                %2648 = vst [vmem:[%s2420 + $0x708] sm:$0xff] %v2647
                %v2649 = vld [vmem:[%s2419 + $0x390] sm:$0xff]
                %2650 = vst [vmem:[%s2420 + $0x710] sm:$0xff] %v2649
                %v2651 = vld [vmem:[%s2419 + $0x398] sm:$0xff]
                %2652 = vst [vmem:[%s2420 + $0x718] sm:$0xff] %v2651
                %v2653 = vld [vmem:[%s2419 + $0x3a0] sm:$0xff]
                %2654 = vst [vmem:[%s2420 + $0x740] sm:$0xff] %v2653
                %v2655 = vld [vmem:[%s2419 + $0x3a8] sm:$0xff]
                %2656 = vst [vmem:[%s2420 + $0x748] sm:$0xff] %v2655
                %v2657 = vld [vmem:[%s2419 + $0x3b0] sm:$0xff]
                %2658 = vst [vmem:[%s2420 + $0x750] sm:$0xff] %v2657
                %v2659 = vld [vmem:[%s2419 + $0x3b8] sm:$0xff]
                %2660 = vst [vmem:[%s2420 + $0x758] sm:$0xff] %v2659
                %v2661 = vld [vmem:[%s2419 + $0x3c0] sm:$0xff]
                %2662 = vst [vmem:[%s2420 + $0x780] sm:$0xff] %v2661
                %v2663 = vld [vmem:[%s2419 + $0x3c8] sm:$0xff]
                %2664 = vst [vmem:[%s2420 + $0x788] sm:$0xff] %v2663
                %v2665 = vld [vmem:[%s2419 + $0x3d0] sm:$0xff]
                %2666 = vst [vmem:[%s2420 + $0x790] sm:$0xff] %v2665
                %v2667 = vld [vmem:[%s2419 + $0x3d8] sm:$0xff]
                %2668 = vst [vmem:[%s2420 + $0x798] sm:$0xff] %v2667
                %v2669 = vld [vmem:[%s2419 + $0x3e0] sm:$0xff]
                %2670 = vst [vmem:[%s2420 + $0x7c0] sm:$0xff] %v2669
                %v2671 = vld [vmem:[%s2419 + $0x3e8] sm:$0xff]
                %2672 = vst [vmem:[%s2420 + $0x7c8] sm:$0xff] %v2671
                %v2673 = vld [vmem:[%s2419 + $0x3f0] sm:$0xff]
                %2674 = vst [vmem:[%s2420 + $0x7d0] sm:$0xff] %v2673
                %v2675 = vld [vmem:[%s2419 + $0x3f8] sm:$0xff]
                %2676 = vst [vmem:[%s2420 + $0x7d8] sm:$0xff] %v2675
              $region65: #{plainnet_forward.1} parent=59 // loop_footer
                %s2418 = sadd.s32 1, %s2414
              $region66: #{plainnet_forward.1} parent=59 // loop_footer_branch
                %2413 = sbr.rel target = $region62
              $region67: #{plainnet_forward.1} parent=59 // loop_exit
                _
            $region60: #{plainnet_forward.1} parent=55 // pred_fallthru
              _
            // Predicated region
            $region68: #{plainnet_forward.1} parent=55 // pred_check
              _
            $region69: #{plainnet_forward.1} parent=55 // pred_check_branch
              %2678 = sbr.rel target = $region71
            $region70: #{plainnet_forward.1} parent=55 // pred_region
              _
            $region71: #{plainnet_forward.1} parent=55 // pred_fallthru
              _
          $region56: #{plainnet_forward.1} parent=51 // pred_fallthru
            _
          %2679 = vnop
        $region52: #{plainnet_forward.1} parent=47 // pred_fallthru
          _
      $region48: #{plainnet_forward.1} parent=5 // pred_fallthru
        _
      %p2680 = scmp.le.s32.totalorder 2, %s13
      // Predicated region
      $region72: #{plainnet_forward.1} parent=5 // pred_check
        %p2681 = pneg %p2680
      $region73: #{plainnet_forward.1} parent=5 // pred_check_branch
        %2683 = sbr.rel (%p2681) target = $region75
      $region74: #{plainnet_forward.1} parent=5 // pred_region
        %s2684 = ssub.s32 %s13, 2
        // Predicated region
        $region76: #{plainnet_forward.1} parent=74 // pred_check
          %p2685 = pneg %p210
        $region77: #{plainnet_forward.1} parent=74 // pred_check_branch
          %2687 = sbr.rel (%p2685) target = $region79
        $region78: #{plainnet_forward.1} parent=74 // pred_region
          %s2688 = sand.u32 %s195, 1
          %s2689 = sand.u32 %s195, 1
          %s2690 = smul.addr %s2689, 1024
          %s2691 = scalar_lea.vmem [#allocation4], %s2690
        $region79: #{plainnet_forward.1} parent=74 // pred_fallthru
          _
      $region75: #{plainnet_forward.1} parent=5 // pred_fallthru
        _
    $region6: #{plainnet_forward.1} parent=1 // loop_footer
      %s17 = sadd.s32 1, %s13
    $region7: #{plainnet_forward.1} parent=1 // loop_footer_branch
      %12 = sbr.rel target = $region3
    $region8: #{plainnet_forward.1} parent=1 // loop_exit
      _

</llo_original>
